<compile_context>
chip_gen: v7x
topology: tpu7x:2x2x1
jax: 0.10.0
libtpu: 0.0.40
codegen_flags: <defaults>
</compile_context>

<pallas_src>
import jax
import jax.numpy as jnp
from jax.experimental import pallas as pl
from jax.experimental.pallas import tpu as pltpu

D_IN = 28 * 28          # 784
D_IN_PAD = 896          # 7 * 128
HIDDEN = 512
D_OUT = 10
D_OUT_PAD = 128
MAX_TB = 2048           # max batch-tile rows (~13 MiB double-buffered footprint)
VMEM_LIMIT_BYTES = 32 * 1024 * 1024   # explicit; v5e default scoped VMEM is 16 MiB


def _round_up(n, m):
    return ((n + m - 1) // m) * m


def _cdiv(a, b):
    return -(-a // b)


def mlp_kernel(x_ref, w1_ref, b1_ref, w2_ref, b2_ref, w3_ref, b3_ref, o_ref):
    # fc1 + ReLU  (bf16 MXU inputs, f32 accumulate, f32 elementwise)
    h1 = jnp.dot(x_ref[...], w1_ref[...], preferred_element_type=jnp.float32)
    h1 = jnp.maximum(h1 + b1_ref[...], 0.0).astype(jnp.bfloat16)
    # fc2 + ReLU
    h2 = jnp.dot(h1, w2_ref[...], preferred_element_type=jnp.float32)
    h2 = jnp.maximum(h2 + b2_ref[...], 0.0).astype(jnp.bfloat16)
    # fc3 (logits, lane-dense 128-wide padded output)
    o_ref[...] = (
        jnp.dot(h2, w3_ref[...], preferred_element_type=jnp.float32) + b3_ref[...]
    )


def prepare_params(w1, b1, w2, b2, w3, b3):
    """One-time pad + cast of Linear params.

    Weights are stored as (in_features, out_features) — the transpose of
    PyTorch's nn.Linear layout — so the kernel computes x @ W + b on the MXU.
    Call once and reuse the result for every forward pass.
    """
    w1_p = jnp.zeros((D_IN_PAD, HIDDEN), jnp.bfloat16).at[:D_IN, :].set(
        w1.astype(jnp.bfloat16))
    w2_p = w2.astype(jnp.bfloat16)
    w3_p = jnp.zeros((HIDDEN, D_OUT_PAD), jnp.bfloat16).at[:, :D_OUT].set(
        w3.astype(jnp.bfloat16))
    b1_p = b1.reshape(1, HIDDEN).astype(jnp.float32)
    b2_p = b2.reshape(1, HIDDEN).astype(jnp.float32)
    b3_p = jnp.zeros((1, D_OUT_PAD), jnp.float32).at[0, :D_OUT].set(
        b3.astype(jnp.float32))
    return w1_p, b1_p, w2_p, b2_p, w3_p, b3_p


def mlp_forward(x, prepared_params):
    """x: (B, 1, 28, 28) or (B, 784) float32. Returns (B, 10) float32."""
    B = x.shape[0]
    x2d = x.reshape(B, -1).astype(jnp.float32)           # (B, 784)

    # --- batch tiling -------------------------------------------------------
    # >= 2 (even) tiles so v7x megacore can split; tile rows multiple of 16
    # (bf16 sublane packing); pad only to tb * n_tiles, never to MAX_TB.
    n_tiles = _cdiv(B, MAX_TB)
    n_tiles = max(2, n_tiles + (n_tiles % 2))
    tb = _round_up(_cdiv(B, n_tiles), 16)
    b_pad = tb * n_tiles

    # --- pad + cast activations (zero padding contributes nothing) ----------
    x_p = jnp.zeros((b_pad, D_IN_PAD), jnp.bfloat16)
    x_p = x_p.at[:B, :D_IN].set(x2d.astype(jnp.bfloat16))

    w1_p, b1_p, w2_p, b2_p, w3_p, b3_p = prepared_params

    # --- BlockSpecs: x / out tiled on batch; weights constant (VMEM-resident) --
    vmem = pltpu.VMEM
    x_spec = pl.BlockSpec((tb, D_IN_PAD), lambda i: (i, 0), memory_space=vmem)
    o_spec = pl.BlockSpec((tb, D_OUT_PAD), lambda i: (i, 0), memory_space=vmem)
    const = lambda shape: pl.BlockSpec(shape, lambda i: (0, 0), memory_space=vmem)

    # Advisory cost estimate so XLA overlaps surrounding cast/pad/slice ops.
    w_elems = D_IN_PAD * HIDDEN + HIDDEN * HIDDEN + HIDDEN * D_OUT_PAD
    flops = 2 * b_pad * w_elems
    bytes_accessed = (b_pad * D_IN_PAD * 2          # x (bf16)
                      + b_pad * D_OUT_PAD * 4       # out (f32)
                      + w_elems * 2                 # weights (bf16)
                      + (2 * HIDDEN + D_OUT_PAD) * 4)  # biases (f32)

    out_pad = pl.pallas_call(
        mlp_kernel,
        out_shape=jax.ShapeDtypeStruct((b_pad, D_OUT_PAD), jnp.float32),
        grid=(n_tiles,),
        in_specs=[
            x_spec,
            const((D_IN_PAD, HIDDEN)), const((1, HIDDEN)),
            const((HIDDEN, HIDDEN)),   const((1, HIDDEN)),
            const((HIDDEN, D_OUT_PAD)), const((1, D_OUT_PAD)),
        ],
        out_specs=o_spec,
        compiler_params=pltpu.CompilerParams(
            dimension_semantics=("parallel",),
            vmem_limit_bytes=VMEM_LIMIT_BYTES),
        cost_estimate=pl.CostEstimate(
            flops=flops, transcendentals=0, bytes_accessed=bytes_accessed),
    )(x_p, w1_p, b1_p, w2_p, b2_p, w3_p, b3_p)

    return out_pad[:B, :D_OUT]


def init_params(key):
    """Deterministic init matching nn.Linear shapes (stored transposed: (in, out))."""
    k1, k2, k3, k4, k5, k6 = jax.random.split(key, 6)

    def linear(kw, kb, fan_in, fan_out):
        bound = 1.0 / jnp.sqrt(fan_in)
        w = jax.random.uniform(kw, (fan_in, fan_out), jnp.float32, -bound, bound)
        b = jax.random.uniform(kb, (fan_out,), jnp.float32, -bound, bound)
        return w, b

    w1, b1 = linear(k1, k2, D_IN, HIDDEN)
    w2, b2 = linear(k3, k4, HIDDEN, HIDDEN)
    w3, b3 = linear(k5, k6, HIDDEN, D_OUT)
    return w1, b1, w2, b2, w3, b3


if __name__ == "__main__":
    key = jax.random.PRNGKey(0)
    kx, kp = jax.random.split(key)

    # Small batch, MNIST-shaped input (NCHW like the PyTorch module expects).
    B = 8
    x = jax.random.normal(kx, (B, 1, 28, 28), dtype=jnp.float32)

    params = init_params(kp)
    prepared = prepare_params(*params)            # one-time weight prep (hoisted)

    fwd = jax.jit(mlp_forward)
    out = fwd(x, prepared)
    out = jax.block_until_ready(out)

    # Reference with matching bf16-input / f32-accumulate math (dropout = identity).
    w1, b1, w2, b2, w3, b3 = params
    xr = x.reshape(B, -1).astype(jnp.bfloat16)
    h1 = jnp.maximum(
        jnp.dot(xr, w1.astype(jnp.bfloat16), preferred_element_type=jnp.float32)
        + b1, 0.0).astype(jnp.bfloat16)
    h2 = jnp.maximum(
        jnp.dot(h1, w2.astype(jnp.bfloat16), preferred_element_type=jnp.float32)
        + b2, 0.0).astype(jnp.bfloat16)
    ref = jnp.dot(h2, w3.astype(jnp.bfloat16),
                  preferred_element_type=jnp.float32) + b3

    assert out.shape == (B, D_OUT)
    assert jnp.allclose(out, ref, atol=1e-2, rtol=1e-2)

    print("KERNEL_OK")
</pallas_src>

<mosaic_0001>
module attributes {stable_mosaic.version = 11 : i64} {
  func.func @mlp_kernel(%arg0: i32, %arg1: memref<16x896xbf16, #tpu.memory_space<vmem>>, %arg2: memref<896x512xbf16, #tpu.memory_space<vmem>>, %arg3: memref<1x512xf32, #tpu.memory_space<vmem>>, %arg4: memref<512x512xbf16, #tpu.memory_space<vmem>>, %arg5: memref<1x512xf32, #tpu.memory_space<vmem>>, %arg6: memref<512x128xbf16, #tpu.memory_space<vmem>>, %arg7: memref<1x128xf32, #tpu.memory_space<vmem>>, %arg8: memref<16x128xf32, #tpu.memory_space<vmem>>) attributes {dimension_semantics = [#tpu.dimension_semantics<parallel>], iteration_bounds = array<i64: 2>, scalar_prefetch = 0 : i64, scratch_operands = 0 : i64, tpu.core_type = #tpu.core_type<tc>, window_params = [{transform_indices = @transform_0, window_bounds = array<i64: 16, 896>}, {pipeline_mode = #tpu.pipeline_mode<synchronous>, transform_indices = @transform_1, window_bounds = array<i64: 896, 512>}, {pipeline_mode = #tpu.pipeline_mode<synchronous>, transform_indices = @transform_2, window_bounds = array<i64: 1, 512>}, {pipeline_mode = #tpu.pipeline_mode<synchronous>, transform_indices = @transform_3, window_bounds = array<i64: 512, 512>}, {pipeline_mode = #tpu.pipeline_mode<synchronous>, transform_indices = @transform_4, window_bounds = array<i64: 1, 512>}, {pipeline_mode = #tpu.pipeline_mode<synchronous>, transform_indices = @transform_5, window_bounds = array<i64: 512, 128>}, {pipeline_mode = #tpu.pipeline_mode<synchronous>, transform_indices = @transform_6, window_bounds = array<i64: 1, 128>}, {transform_indices = @transform_7, window_bounds = array<i64: 16, 128>}]} {
    %c0 = arith.constant 0 : index
    %c0_0 = arith.constant 0 : index
    %0 = vector.load %arg1[%c0, %c0_0] : memref<16x896xbf16, #tpu.memory_space<vmem>>, vector<16x896xbf16>
    %c0_1 = arith.constant 0 : index
    %c0_2 = arith.constant 0 : index
    %1 = vector.load %arg2[%c0_1, %c0_2] : memref<896x512xbf16, #tpu.memory_space<vmem>>, vector<896x512xbf16>
    %cst = arith.constant dense<0.000000e+00> : vector<16x512xf32>
    %2 = tpu.matmul %0, %1, %cst {dimension_numbers = #tpu.dot_dimension_numbers<[1], [0], [0], [1], [0, 0, 1, 1], [], []>} : vector<16x896xbf16>, vector<896x512xbf16>, vector<16x512xf32> -> vector<16x512xf32>
    %c0_3 = arith.constant 0 : index
    %c0_4 = arith.constant 0 : index
    %3 = vector.load %arg3[%c0_3, %c0_4] : memref<1x512xf32, #tpu.memory_space<vmem>>, vector<1x512xf32>
    %4 = vector.broadcast %3 : vector<1x512xf32> to vector<16x512xf32>
    %5 = arith.addf %2, %4 : vector<16x512xf32>
    %cst_5 = arith.constant 0.000000e+00 : f32
    %6 = vector.broadcast %cst_5 : f32 to vector<16x512xf32>
    %7 = arith.maximumf %5, %6 : vector<16x512xf32>
    %8 = arith.truncf %7 : vector<16x512xf32> to vector<16x512xbf16>
    %c0_6 = arith.constant 0 : index
    %c0_7 = arith.constant 0 : index
    %9 = vector.load %arg4[%c0_6, %c0_7] : memref<512x512xbf16, #tpu.memory_space<vmem>>, vector<512x512xbf16>
    %cst_8 = arith.constant dense<0.000000e+00> : vector<16x512xf32>
    %10 = tpu.matmul %8, %9, %cst_8 {dimension_numbers = #tpu.dot_dimension_numbers<[1], [0], [0], [1], [0, 0, 1, 1], [], []>} : vector<16x512xbf16>, vector<512x512xbf16>, vector<16x512xf32> -> vector<16x512xf32>
    %c0_9 = arith.constant 0 : index
    %c0_10 = arith.constant 0 : index
    %11 = vector.load %arg5[%c0_9, %c0_10] : memref<1x512xf32, #tpu.memory_space<vmem>>, vector<1x512xf32>
    %12 = vector.broadcast %11 : vector<1x512xf32> to vector<16x512xf32>
    %13 = arith.addf %10, %12 : vector<16x512xf32>
    %cst_11 = arith.constant 0.000000e+00 : f32
    %14 = vector.broadcast %cst_11 : f32 to vector<16x512xf32>
    %15 = arith.maximumf %13, %14 : vector<16x512xf32>
    %16 = arith.truncf %15 : vector<16x512xf32> to vector<16x512xbf16>
    %c0_12 = arith.constant 0 : index
    %c0_13 = arith.constant 0 : index
    %17 = vector.load %arg6[%c0_12, %c0_13] : memref<512x128xbf16, #tpu.memory_space<vmem>>, vector<512x128xbf16>
    %cst_14 = arith.constant dense<0.000000e+00> : vector<16x128xf32>
    %18 = tpu.matmul %16, %17, %cst_14 {dimension_numbers = #tpu.dot_dimension_numbers<[1], [0], [0], [1], [0, 0, 1, 1], [], []>} : vector<16x512xbf16>, vector<512x128xbf16>, vector<16x128xf32> -> vector<16x128xf32>
    %c0_15 = arith.constant 0 : index
    %c0_16 = arith.constant 0 : index
    %19 = vector.load %arg7[%c0_15, %c0_16] : memref<1x128xf32, #tpu.memory_space<vmem>>, vector<1x128xf32>
    %20 = vector.broadcast %19 : vector<1x128xf32> to vector<16x128xf32>
    %21 = arith.addf %18, %20 : vector<16x128xf32>
    %c0_17 = arith.constant 0 : index
    %c0_18 = arith.constant 0 : index
    %22 = vector.load %arg8[%c0_17, %c0_18] : memref<16x128xf32, #tpu.memory_space<vmem>>, vector<16x128xf32>
    tpu.vector_store %arg8[%c0_17, %c0_18], %21 {strides = array<i32>} : memref<16x128xf32, #tpu.memory_space<vmem>>, vector<16x128xf32>,
    return
  }
  func.func @transform_0(%arg0: i32) -> (i32, i32) {
    %c0_i32 = arith.constant 0 : i32
    %c0_i32_0 = arith.constant 0 : i32
    return %arg0, %c0_i32 : i32, i32
  }
  func.func @transform_1(%arg0: i32) -> (i32, i32) {
    %c0_i32 = arith.constant 0 : i32
    %c0_i32_0 = arith.constant 0 : i32
    %c0_i32_1 = arith.constant 0 : i32
    return %c0_i32, %c0_i32_0 : i32, i32
  }
  func.func @transform_2(%arg0: i32) -> (i32, i32) {
    %c0_i32 = arith.constant 0 : i32
    %c0_i32_0 = arith.constant 0 : i32
    %c0_i32_1 = arith.constant 0 : i32
    return %c0_i32, %c0_i32_0 : i32, i32
  }
  func.func @transform_3(%arg0: i32) -> (i32, i32) {
    %c0_i32 = arith.constant 0 : i32
    %c0_i32_0 = arith.constant 0 : i32
    %c0_i32_1 = arith.constant 0 : i32
    return %c0_i32, %c0_i32_0 : i32, i32
  }
  func.func @transform_4(%arg0: i32) -> (i32, i32) {
    %c0_i32 = arith.constant 0 : i32
    %c0_i32_0 = arith.constant 0 : i32
    %c0_i32_1 = arith.constant 0 : i32
    return %c0_i32, %c0_i32_0 : i32, i32
  }
  func.func @transform_5(%arg0: i32) -> (i32, i32) {
    %c0_i32 = arith.constant 0 : i32
    %c0_i32_0 = arith.constant 0 : i32
    %c0_i32_1 = arith.constant 0 : i32
    return %c0_i32, %c0_i32_0 : i32, i32
  }
  func.func @transform_6(%arg0: i32) -> (i32, i32) {
    %c0_i32 = arith.constant 0 : i32
    %c0_i32_0 = arith.constant 0 : i32
    %c0_i32_1 = arith.constant 0 : i32
    return %c0_i32, %c0_i32_0 : i32, i32
  }
  func.func @transform_7(%arg0: i32) -> (i32, i32) {
    %c0_i32 = arith.constant 0 : i32
    %c0_i32_0 = arith.constant 0 : i32
    return %arg0, %c0_i32 : i32, i32
  }
}

</mosaic_0001>

<llo_original>
// kernel: mlp_forward.1
$region0: #{mlp_forward.1}
  #allocation0 [shape = 'u32[]', space=smem, size = 0x4, offset = 0x4, fixed_abs, tag = 'smem constant byte address 0x4 - core index']
  #allocation1 [shape = 'u32[144,128]{1,0:T(1,128)}', space=vmem, size = 0x12000, scoped, tag = 'internal scratch']
  %s0 = inlined_call_operand.vmem [shape: bf16[32,896], index: 0, kind: input, shape index: {}]
  %s1 = inlined_call_operand.hbm [shape: bf16[896,512], index: 1, kind: input, shape index: {}]
  %s2 = inlined_call_operand.vmem [shape: f32[1,512], index: 2, kind: input, shape index: {}]
  %s3 = inlined_call_operand.hbm [shape: bf16[512,512], index: 3, kind: input, shape index: {}]
  %s4 = inlined_call_operand.vmem [shape: f32[1,512], index: 4, kind: input, shape index: {}]
  %s5 = inlined_call_operand.vmem [shape: bf16[512,128], index: 5, kind: input, shape index: {}]
  %s6 = inlined_call_operand.vmem [shape: f32[1,128], index: 6, kind: input, shape index: {}]
  %s7 = inlined_call_operand.vmem [shape: f32[32,128], index: 7, kind: output, shape index: {}]
  %s8 = sld [smem:[#allocation0]]
  $region69: #{mlp_forward.1} parent=0
    _
  %s10 = ssub.s32 1, %s8
  %s11 = scalar_select 0, %s10, %s8
  $region1: #{mlp_forward.1} parent=0
    #allocation2 [shape = 'u8[917504]{0}', space=vmem, size = 0xe0000, scoped, tag = 'input window, operand 1, single buffered']
    #allocation3 [shape = 's32[2]{0}', space=sflag, size = 0x8, scoped, tag = 'scoped memory for mlp_forward.1']
    #allocation4 [shape = 'u8[524288]{0}', space=vmem, size = 0x80000, scoped, tag = 'input window, operand 3, single buffered']
    #allocation5 [shape = 's32[1]{0}', space=sflag, size = 0x4, scoped, tag = 'scoped memory for mlp_forward.1']
    %12 = vsyncpa [#allocation3], 0
    %13 = vsyncpa [#allocation5], 0
    loop: start=0, step=1, limit=4
    $region2: #{mlp_forward.1} parent=1 // loop_pre_header
      _
    $region3: #{mlp_forward.1} parent=1 // loop_header
      %s15 = sphi 0, %s19
      %p16 = scmp.ge.s32.totalorder %s15, 4
      %s25 = sphi 0, %s27
      %s28 = sphi 0, %s25
      %s29 = sphi 0, %s28
      %s45 = sphi 0, %s29
      %s49 = sphi 0, %s49
      %s51 = sphi 0, %s49
      %s52 = sphi 0, %s51
      %s66 = sphi 0, %s52
      %s70 = sphi 0, %s70
      %s72 = sphi 0, %s70
      %s73 = sphi 0, %s72
      %s87 = sphi 0, %s73
      %s91 = sphi 0, %s91
      %s93 = sphi 0, %s91
      %s94 = sphi 0, %s93
      %s108 = sphi 0, %s94
      %s112 = sphi 0, %s112
      %s114 = sphi 0, %s112
      %s115 = sphi 0, %s114
      %s129 = sphi 0, %s115
      %s133 = sphi 0, %s133
      %s135 = sphi 0, %s133
      %s136 = sphi 0, %s135
      %s150 = sphi 0, %s136
      %s154 = sphi 0, %s154
      %s156 = sphi 0, %s154
      %s157 = sphi 0, %s156
      %s171 = sphi 0, %s157
      %s177 = sphi 0, %s179
      %s180 = sphi 0, %s177
      %s181 = sphi 0, %s180
      %s197 = sphi 0, %s181
    $region4: #{mlp_forward.1} parent=1 // loop_header_branch
      %18 = sbr.rel (%p16) target = $region8
    $region5: #{mlp_forward.1} parent=1 // loop_body
      %s20 = ssub.s32 %s15, 1
      %s21 = ssub.s32 %s15, 2
      %s22 = sadd.s32 %s15, 1
      %s23 = ssub.s32 %s15, %s22
      %p24 = scmp.eq.s32.totalorder %s23, 0
      %s26 = sadd.s32 %s25, 1
      %s27 = scalar_select %p24, %s25, %s26
      %p30 = pneg %p24
      %p31 = scmp.eq.s32.totalorder %s15, 1
      %p32 = por %p30, %p31
      %p33 = scmp.ne.s32.totalorder %s25, %s28
      %p34 = scmp.eq.s32.totalorder %s15, 0
      %p35 = por %p33, %p34
      %p36 = scmp.ne.s32.totalorder %s25, %s28
      %p37 = scmp.eq.s32.totalorder %s20, 1
      %p38 = por %p36, %p37
      %p39 = scmp.ne.s32.totalorder %s28, %s29
      %p40 = scmp.eq.s32.totalorder %s20, 0
      %p41 = por %p39, %p40
      %p42 = scmp.ne.s32.totalorder %s28, %s29
      %p43 = scmp.eq.s32.totalorder %s21, 1
      %p44 = por %p42, %p43
      %p46 = scmp.ne.s32.totalorder %s29, %s45
      %p47 = scmp.eq.s32.totalorder %s21, 0
      %p48 = por %p46, %p47
      %s50 = sadd.s32 %s49, 1
      %p53 = scmp.eq.s32.totalorder %s15, 1
      %p54 = scmp.ne.s32.totalorder %s49, %s51
      %p55 = scmp.eq.s32.totalorder %s15, 0
      %p56 = por %p54, %p55
      %p57 = scmp.ne.s32.totalorder %s49, %s51
      %p58 = scmp.eq.s32.totalorder %s20, 1
      %p59 = por %p57, %p58
      %p60 = scmp.ne.s32.totalorder %s51, %s52
      %p61 = scmp.eq.s32.totalorder %s20, 0
      %p62 = por %p60, %p61
      %p63 = scmp.ne.s32.totalorder %s51, %s52
      %p64 = scmp.eq.s32.totalorder %s21, 1
      %p65 = por %p63, %p64
      %p67 = scmp.ne.s32.totalorder %s52, %s66
      %p68 = scmp.eq.s32.totalorder %s21, 0
      %p69 = por %p67, %p68
      %s71 = sadd.s32 %s70, 1
      %p74 = scmp.eq.s32.totalorder %s15, 1
      %p75 = scmp.ne.s32.totalorder %s70, %s72
      %p76 = scmp.eq.s32.totalorder %s15, 0
      %p77 = por %p75, %p76
      %p78 = scmp.ne.s32.totalorder %s70, %s72
      %p79 = scmp.eq.s32.totalorder %s20, 1
      %p80 = por %p78, %p79
      %p81 = scmp.ne.s32.totalorder %s72, %s73
      %p82 = scmp.eq.s32.totalorder %s20, 0
      %p83 = por %p81, %p82
      %p84 = scmp.ne.s32.totalorder %s72, %s73
      %p85 = scmp.eq.s32.totalorder %s21, 1
      %p86 = por %p84, %p85
      %p88 = scmp.ne.s32.totalorder %s73, %s87
      %p89 = scmp.eq.s32.totalorder %s21, 0
      %p90 = por %p88, %p89
      %s92 = sadd.s32 %s91, 1
      %p95 = scmp.eq.s32.totalorder %s15, 1
      %p96 = scmp.ne.s32.totalorder %s91, %s93
      %p97 = scmp.eq.s32.totalorder %s15, 0
      %p98 = por %p96, %p97
      %p99 = scmp.ne.s32.totalorder %s91, %s93
      %p100 = scmp.eq.s32.totalorder %s20, 1
      %p101 = por %p99, %p100
      %p102 = scmp.ne.s32.totalorder %s93, %s94
      %p103 = scmp.eq.s32.totalorder %s20, 0
      %p104 = por %p102, %p103
      %p105 = scmp.ne.s32.totalorder %s93, %s94
      %p106 = scmp.eq.s32.totalorder %s21, 1
      %p107 = por %p105, %p106
      %p109 = scmp.ne.s32.totalorder %s94, %s108
      %p110 = scmp.eq.s32.totalorder %s21, 0
      %p111 = por %p109, %p110
      %s113 = sadd.s32 %s112, 1
      %p116 = scmp.eq.s32.totalorder %s15, 1
      %p117 = scmp.ne.s32.totalorder %s112, %s114
      %p118 = scmp.eq.s32.totalorder %s15, 0
      %p119 = por %p117, %p118
      %p120 = scmp.ne.s32.totalorder %s112, %s114
      %p121 = scmp.eq.s32.totalorder %s20, 1
      %p122 = por %p120, %p121
      %p123 = scmp.ne.s32.totalorder %s114, %s115
      %p124 = scmp.eq.s32.totalorder %s20, 0
      %p125 = por %p123, %p124
      %p126 = scmp.ne.s32.totalorder %s114, %s115
      %p127 = scmp.eq.s32.totalorder %s21, 1
      %p128 = por %p126, %p127
      %p130 = scmp.ne.s32.totalorder %s115, %s129
      %p131 = scmp.eq.s32.totalorder %s21, 0
      %p132 = por %p130, %p131
      %s134 = sadd.s32 %s133, 1
      %p137 = scmp.eq.s32.totalorder %s15, 1
      %p138 = scmp.ne.s32.totalorder %s133, %s135
      %p139 = scmp.eq.s32.totalorder %s15, 0
      %p140 = por %p138, %p139
      %p141 = scmp.ne.s32.totalorder %s133, %s135
      %p142 = scmp.eq.s32.totalorder %s20, 1
      %p143 = por %p141, %p142
      %p144 = scmp.ne.s32.totalorder %s135, %s136
      %p145 = scmp.eq.s32.totalorder %s20, 0
      %p146 = por %p144, %p145
      %p147 = scmp.ne.s32.totalorder %s135, %s136
      %p148 = scmp.eq.s32.totalorder %s21, 1
      %p149 = por %p147, %p148
      %p151 = scmp.ne.s32.totalorder %s136, %s150
      %p152 = scmp.eq.s32.totalorder %s21, 0
      %p153 = por %p151, %p152
      %s155 = sadd.s32 %s154, 1
      %p158 = scmp.eq.s32.totalorder %s15, 1
      %p159 = scmp.ne.s32.totalorder %s154, %s156
      %p160 = scmp.eq.s32.totalorder %s15, 0
      %p161 = por %p159, %p160
      %p162 = scmp.ne.s32.totalorder %s154, %s156
      %p163 = scmp.eq.s32.totalorder %s20, 1
      %p164 = por %p162, %p163
      %p165 = scmp.ne.s32.totalorder %s156, %s157
      %p166 = scmp.eq.s32.totalorder %s20, 0
      %p167 = por %p165, %p166
      %p168 = scmp.ne.s32.totalorder %s156, %s157
      %p169 = scmp.eq.s32.totalorder %s21, 1
      %p170 = por %p168, %p169
      %p172 = scmp.ne.s32.totalorder %s157, %s171
      %p173 = scmp.eq.s32.totalorder %s21, 0
      %p174 = por %p172, %p173
      %s175 = ssub.s32 %s15, %s22
      %p176 = scmp.eq.s32.totalorder %s175, 0
      %s178 = sadd.s32 %s177, 1
      %s179 = scalar_select %p176, %s177, %s178
      %p182 = pneg %p176
      %p183 = scmp.eq.s32.totalorder %s15, 1
      %p184 = por %p182, %p183
      %p185 = scmp.ne.s32.totalorder %s177, %s180
      %p186 = scmp.eq.s32.totalorder %s15, 0
      %p187 = por %p185, %p186
      %p188 = scmp.ne.s32.totalorder %s177, %s180
      %p189 = scmp.eq.s32.totalorder %s20, 1
      %p190 = por %p188, %p189
      %p191 = scmp.ne.s32.totalorder %s180, %s181
      %p192 = scmp.eq.s32.totalorder %s20, 0
      %p193 = por %p191, %p192
      %p194 = scmp.ne.s32.totalorder %s180, %s181
      %p195 = scmp.eq.s32.totalorder %s21, 1
      %p196 = por %p194, %p195
      %p198 = scmp.ne.s32.totalorder %s181, %s197
      %p199 = scmp.eq.s32.totalorder %s21, 0
      %p200 = por %p198, %p199
      %p201 = scmp.le.s32.totalorder 1, %s15
      %p202 = scmp.lt.s32.totalorder %s15, 3
      %p203 = pnand %p201, %p202
      %p204 = pneg %p203
      // Predicated region
      $region9: #{mlp_forward.1} parent=5 // pred_check
        _
      $region10: #{mlp_forward.1} parent=5 // pred_check_branch
        %206 = sbr.rel (%p203) target = $region12
      $region11: #{mlp_forward.1} parent=5 // pred_region
        %s207 = ssub.s32 %s15, 1
        // Predicated region
        $region13: #{mlp_forward.1} parent=11 // pred_check
          %p208 = pneg %p62
        $region14: #{mlp_forward.1} parent=11 // pred_check_branch
          %210 = sbr.rel (%p208) target = $region16
        $region15: #{mlp_forward.1} parent=11 // pred_region
          %s212 = ssub.s32 28672, 28672
          %213 = vsyncadd [#allocation3], %s212
          %s214 = sshll.u32 [#allocation2], 4
          %s215 = int_to_ptr.vmem [resolvable:$true] %s214
          %220 = dma.hbm_to_vmem [thread:$0]  %s1, 28672, %s215, [#allocation3], 256, 256, 16
        $region16: #{mlp_forward.1} parent=11 // pred_fallthru
          _
        // Predicated region
        $region17: #{mlp_forward.1} parent=11 // pred_check
          %p221 = pneg %p83
        $region18: #{mlp_forward.1} parent=11 // pred_check_branch
          %223 = sbr.rel (%p221) target = $region20
        $region19: #{mlp_forward.1} parent=11 // pred_region
          _
        $region20: #{mlp_forward.1} parent=11 // pred_fallthru
          _
        // Predicated region
        $region21: #{mlp_forward.1} parent=11 // pred_check
          %p224 = pneg %p104
        $region22: #{mlp_forward.1} parent=11 // pred_check_branch
          %226 = sbr.rel (%p224) target = $region24
        $region23: #{mlp_forward.1} parent=11 // pred_region
          %s228 = ssub.s32 16384, 16384
          %229 = vsyncadd [#allocation5], %s228
          %s230 = sshll.u32 [#allocation4], 4
          %s231 = int_to_ptr.vmem [resolvable:$true] %s230
          %236 = dma.hbm_to_vmem [thread:$0]  %s3, 16384, %s231, [#allocation5], 256, 256, 16
        $region24: #{mlp_forward.1} parent=11 // pred_fallthru
          _
        // Predicated region
        $region25: #{mlp_forward.1} parent=11 // pred_check
          %p237 = pneg %p125
        $region26: #{mlp_forward.1} parent=11 // pred_check_branch
          %239 = sbr.rel (%p237) target = $region28
        $region27: #{mlp_forward.1} parent=11 // pred_region
          _
        $region28: #{mlp_forward.1} parent=11 // pred_fallthru
          _
        // Predicated region
        $region29: #{mlp_forward.1} parent=11 // pred_check
          %p240 = pneg %p146
        $region30: #{mlp_forward.1} parent=11 // pred_check_branch
          %242 = sbr.rel (%p240) target = $region32
        $region31: #{mlp_forward.1} parent=11 // pred_region
          _
        $region32: #{mlp_forward.1} parent=11 // pred_fallthru
          _
        // Predicated region
        $region33: #{mlp_forward.1} parent=11 // pred_check
          %p243 = pneg %p167
        $region34: #{mlp_forward.1} parent=11 // pred_check_branch
          %245 = sbr.rel (%p243) target = $region36
        $region35: #{mlp_forward.1} parent=11 // pred_region
          _
        $region36: #{mlp_forward.1} parent=11 // pred_fallthru
          _
      $region12: #{mlp_forward.1} parent=5 // pred_fallthru
        _
      %p246 = scmp.lt.s32.totalorder %s15, 2
      // Predicated region
      $region37: #{mlp_forward.1} parent=5 // pred_check
        %p247 = pneg %p246
      $region38: #{mlp_forward.1} parent=5 // pred_check_branch
        %249 = sbr.rel (%p247) target = $region40
      $region39: #{mlp_forward.1} parent=5 // pred_region
        // Predicated region
        $region41: #{mlp_forward.1} parent=39 // pred_check
          %p250 = pneg %p35
        $region42: #{mlp_forward.1} parent=39 // pred_check_branch
          %252 = sbr.rel (%p250) target = $region44
        $region43: #{mlp_forward.1} parent=39 // pred_region
          %s253 = smul.u32 2, %s15
          %p254 = scmp.lt.s32.totalorder %s253, 3
          %s255 = scalar_select %p254, %s253, 3
          %s256 = smul.addr %s255, 7
          %s257 = smul.addr %s256, 4
          %s258 = scalar_lea.vmem %s0, %s257
          %s259 = smul.u32 2, %s15
        $region44: #{mlp_forward.1} parent=39 // pred_fallthru
          _
      $region40: #{mlp_forward.1} parent=5 // pred_fallthru
        _
      %p260 = scmp.le.s32.totalorder 1, %s15
      %p261 = scmp.lt.s32.totalorder %s15, 3
      %p262 = pnand %p260, %p261
      %p263 = pneg %p262
      // Predicated region
      $region45: #{mlp_forward.1} parent=5 // pred_check
        _
      $region46: #{mlp_forward.1} parent=5 // pred_check_branch
        %265 = sbr.rel (%p262) target = $region48
      $region47: #{mlp_forward.1} parent=5 // pred_region
        %s266 = ssub.s32 %s15, 1
        // Predicated region
        $region49: #{mlp_forward.1} parent=47 // pred_check
          %p267 = pneg %p62
        $region50: #{mlp_forward.1} parent=47 // pred_check_branch
          %269 = sbr.rel (%p267) target = $region52
        $region51: #{mlp_forward.1} parent=47 // pred_region
          %270 = dma.done [#allocation3], 28672
        $region52: #{mlp_forward.1} parent=47 // pred_fallthru
          _
        // Predicated region
        $region53: #{mlp_forward.1} parent=47 // pred_check
          %p271 = pneg %p104
        $region54: #{mlp_forward.1} parent=47 // pred_check_branch
          %273 = sbr.rel (%p271) target = $region56
        $region55: #{mlp_forward.1} parent=47 // pred_region
          %274 = dma.done [#allocation5], 16384
        $region56: #{mlp_forward.1} parent=47 // pred_fallthru
          _
        %s275 = smul.u32 2, %s20
        %p276 = scmp.lt.s32.totalorder %s275, 3
        %s277 = scalar_select %p276, %s275, 3
        %s278 = smul.addr %s277, 7
        %s279 = smul.addr %s278, 4
        %s280 = scalar_lea.vmem %s0, %s279
        %p281 = pneg %p41
        %p282 = pneg %p38
        %p283 = pneg %p62
        %p284 = pneg %p59
        %p285 = pneg %p83
        %p286 = pneg %p80
        %p287 = pneg %p104
        %p288 = pneg %p101
        %p289 = pneg %p125
        %p290 = pneg %p122
        %p291 = pneg %p146
        %p292 = pneg %p143
        %p293 = pneg %p167
        %p294 = pneg %p164
        %p295 = pneg %p193
        %p296 = pneg %p190
        %s297 = smul.u32 2, %s20
        %p298 = scmp.lt.s32.totalorder %s297, 3
        %s299 = scalar_select %p298, %s297, 3
        %s300 = smul.addr %s299, 8
        %s301 = scalar_lea.vmem %s7, %s300
        %s302 = smul.u32 2, %s20
        %p303 = scmp.lt.s32.totalorder %s302, 3
        %s304 = scalar_select %p303, %s302, 3
        %s305 = smul.addr %s304, 7
        %s306 = smul.addr %s305, 4
        %s307 = scalar_lea.vmem %s0, %s306
        %s308 = smul.u32 2, %s20
        %s309 = smul.u32 2, %s20
        %p310 = scmp.lt.s32.totalorder %s309, 3
        %s311 = scalar_select %p310, %s309, 3
        %s312 = smul.addr %s311, 8
        %s313 = scalar_lea.vmem %s7, %s312
        %s314 = smul.u32 2, %s20
        %v316 = vld [vmem:[%s307] sm:$0xff]
        %v317 = vld [vmem:[%s307 + $0x8] sm:$0xff]
        %v318 = vld [vmem:[%s307 + $0x10] sm:$0xff]
        %v319 = vld [vmem:[%s307 + $0x18] sm:$0xf]
        %v320 = vld [vmem:[%s307 + $0x1c] sm:$0xff]
        %v321 = vld [vmem:[%s307 + $0x24] sm:$0xff]
        %v322 = vld [vmem:[%s307 + $0x2c] sm:$0xff]
        %v323 = vld [vmem:[%s307 + $0x34] sm:$0xf]
        %v324 = vld [vmem:[#allocation2] sm:$0xff]
        %v325 = vld [vmem:[#allocation2 + $0x8] sm:$0xff]
        %v326 = vld [vmem:[#allocation2 + $0x10] sm:$0xff]
        %v327 = vld [vmem:[#allocation2 + $0x18] sm:$0xff]
        %v328 = vld [vmem:[#allocation2 + $0x20] sm:$0xff]
        %v329 = vld [vmem:[#allocation2 + $0x28] sm:$0xff]
        %v330 = vld [vmem:[#allocation2 + $0x30] sm:$0xff]
        %v331 = vld [vmem:[#allocation2 + $0x38] sm:$0xff]
        %v332 = vld [vmem:[#allocation2 + $0x40] sm:$0xff]
        %v333 = vld [vmem:[#allocation2 + $0x48] sm:$0xff]
        %v334 = vld [vmem:[#allocation2 + $0x50] sm:$0xff]
        %v335 = vld [vmem:[#allocation2 + $0x58] sm:$0xff]
        %v336 = vld [vmem:[#allocation2 + $0x60] sm:$0xff]
        %v337 = vld [vmem:[#allocation2 + $0x68] sm:$0xff]
        %v338 = vld [vmem:[#allocation2 + $0x70] sm:$0xff]
        %v339 = vld [vmem:[#allocation2 + $0x78] sm:$0xff]
        %v340 = vld [vmem:[#allocation2 + $0x80] sm:$0xff]
        %v341 = vld [vmem:[#allocation2 + $0x88] sm:$0xff]
        %v342 = vld [vmem:[#allocation2 + $0x90] sm:$0xff]
        %v343 = vld [vmem:[#allocation2 + $0x98] sm:$0xff]
        %v344 = vld [vmem:[#allocation2 + $0xa0] sm:$0xff]
        %v345 = vld [vmem:[#allocation2 + $0xa8] sm:$0xff]
        %v346 = vld [vmem:[#allocation2 + $0xb0] sm:$0xff]
        %v347 = vld [vmem:[#allocation2 + $0xb8] sm:$0xff]
        %v348 = vld [vmem:[#allocation2 + $0xc0] sm:$0xff]
        %v349 = vld [vmem:[#allocation2 + $0xc8] sm:$0xff]
        %v350 = vld [vmem:[#allocation2 + $0xd0] sm:$0xff]
        %v351 = vld [vmem:[#allocation2 + $0xd8] sm:$0xff]
        %v352 = vld [vmem:[#allocation2 + $0xe0] sm:$0xff]
        %v353 = vld [vmem:[#allocation2 + $0xe8] sm:$0xff]
        %v354 = vld [vmem:[#allocation2 + $0xf0] sm:$0xff]
        %v355 = vld [vmem:[#allocation2 + $0xf8] sm:$0xff]
        %v356 = vld [vmem:[#allocation2 + $0x100] sm:$0xff]
        %v357 = vld [vmem:[#allocation2 + $0x108] sm:$0xff]
        %v358 = vld [vmem:[#allocation2 + $0x110] sm:$0xff]
        %v359 = vld [vmem:[#allocation2 + $0x118] sm:$0xff]
        %v360 = vld [vmem:[#allocation2 + $0x120] sm:$0xff]
        %v361 = vld [vmem:[#allocation2 + $0x128] sm:$0xff]
        %v362 = vld [vmem:[#allocation2 + $0x130] sm:$0xff]
        %v363 = vld [vmem:[#allocation2 + $0x138] sm:$0xff]
        %v364 = vld [vmem:[#allocation2 + $0x140] sm:$0xff]
        %v365 = vld [vmem:[#allocation2 + $0x148] sm:$0xff]
        %v366 = vld [vmem:[#allocation2 + $0x150] sm:$0xff]
        %v367 = vld [vmem:[#allocation2 + $0x158] sm:$0xff]
        %v368 = vld [vmem:[#allocation2 + $0x160] sm:$0xff]
        %v369 = vld [vmem:[#allocation2 + $0x168] sm:$0xff]
        %v370 = vld [vmem:[#allocation2 + $0x170] sm:$0xff]
        %v371 = vld [vmem:[#allocation2 + $0x178] sm:$0xff]
        %v372 = vld [vmem:[#allocation2 + $0x180] sm:$0xff]
        %v373 = vld [vmem:[#allocation2 + $0x188] sm:$0xff]
        %v374 = vld [vmem:[#allocation2 + $0x190] sm:$0xff]
        %v375 = vld [vmem:[#allocation2 + $0x198] sm:$0xff]
        %v376 = vld [vmem:[#allocation2 + $0x1a0] sm:$0xff]
        %v377 = vld [vmem:[#allocation2 + $0x1a8] sm:$0xff]
        %v378 = vld [vmem:[#allocation2 + $0x1b0] sm:$0xff]
        %v379 = vld [vmem:[#allocation2 + $0x1b8] sm:$0xff]
        %v380 = vld [vmem:[#allocation2 + $0x1c0] sm:$0xff]
        %v381 = vld [vmem:[#allocation2 + $0x1c8] sm:$0xff]
        %v382 = vld [vmem:[#allocation2 + $0x1d0] sm:$0xff]
        %v383 = vld [vmem:[#allocation2 + $0x1d8] sm:$0xff]
        %v384 = vld [vmem:[#allocation2 + $0x1e0] sm:$0xff]
        %v385 = vld [vmem:[#allocation2 + $0x1e8] sm:$0xff]
        %v386 = vld [vmem:[#allocation2 + $0x1f0] sm:$0xff]
        %v387 = vld [vmem:[#allocation2 + $0x1f8] sm:$0xff]
        %v388 = vld [vmem:[#allocation2 + $0x200] sm:$0xff]
        %v389 = vld [vmem:[#allocation2 + $0x208] sm:$0xff]
        %v390 = vld [vmem:[#allocation2 + $0x210] sm:$0xff]
        %v391 = vld [vmem:[#allocation2 + $0x218] sm:$0xff]
        %v392 = vld [vmem:[#allocation2 + $0x220] sm:$0xff]
        %v393 = vld [vmem:[#allocation2 + $0x228] sm:$0xff]
        %v394 = vld [vmem:[#allocation2 + $0x230] sm:$0xff]
        %v395 = vld [vmem:[#allocation2 + $0x238] sm:$0xff]
        %v396 = vld [vmem:[#allocation2 + $0x240] sm:$0xff]
        %v397 = vld [vmem:[#allocation2 + $0x248] sm:$0xff]
        %v398 = vld [vmem:[#allocation2 + $0x250] sm:$0xff]
        %v399 = vld [vmem:[#allocation2 + $0x258] sm:$0xff]
        %v400 = vld [vmem:[#allocation2 + $0x260] sm:$0xff]
        %v401 = vld [vmem:[#allocation2 + $0x268] sm:$0xff]
        %v402 = vld [vmem:[#allocation2 + $0x270] sm:$0xff]
        %v403 = vld [vmem:[#allocation2 + $0x278] sm:$0xff]
        %v404 = vld [vmem:[#allocation2 + $0x280] sm:$0xff]
        %v405 = vld [vmem:[#allocation2 + $0x288] sm:$0xff]
        %v406 = vld [vmem:[#allocation2 + $0x290] sm:$0xff]
        %v407 = vld [vmem:[#allocation2 + $0x298] sm:$0xff]
        %v408 = vld [vmem:[#allocation2 + $0x2a0] sm:$0xff]
        %v409 = vld [vmem:[#allocation2 + $0x2a8] sm:$0xff]
        %v410 = vld [vmem:[#allocation2 + $0x2b0] sm:$0xff]
        %v411 = vld [vmem:[#allocation2 + $0x2b8] sm:$0xff]
        %v412 = vld [vmem:[#allocation2 + $0x2c0] sm:$0xff]
        %v413 = vld [vmem:[#allocation2 + $0x2c8] sm:$0xff]
        %v414 = vld [vmem:[#allocation2 + $0x2d0] sm:$0xff]
        %v415 = vld [vmem:[#allocation2 + $0x2d8] sm:$0xff]
        %v416 = vld [vmem:[#allocation2 + $0x2e0] sm:$0xff]
        %v417 = vld [vmem:[#allocation2 + $0x2e8] sm:$0xff]
        %v418 = vld [vmem:[#allocation2 + $0x2f0] sm:$0xff]
        %v419 = vld [vmem:[#allocation2 + $0x2f8] sm:$0xff]
        %v420 = vld [vmem:[#allocation2 + $0x300] sm:$0xff]
        %v421 = vld [vmem:[#allocation2 + $0x308] sm:$0xff]
        %v422 = vld [vmem:[#allocation2 + $0x310] sm:$0xff]
        %v423 = vld [vmem:[#allocation2 + $0x318] sm:$0xff]
        %v424 = vld [vmem:[#allocation2 + $0x320] sm:$0xff]
        %v425 = vld [vmem:[#allocation2 + $0x328] sm:$0xff]
        %v426 = vld [vmem:[#allocation2 + $0x330] sm:$0xff]
        %v427 = vld [vmem:[#allocation2 + $0x338] sm:$0xff]
        %v428 = vld [vmem:[#allocation2 + $0x340] sm:$0xff]
        %v429 = vld [vmem:[#allocation2 + $0x348] sm:$0xff]
        %v430 = vld [vmem:[#allocation2 + $0x350] sm:$0xff]
        %v431 = vld [vmem:[#allocation2 + $0x358] sm:$0xff]
        %v432 = vld [vmem:[#allocation2 + $0x360] sm:$0xff]
        %v433 = vld [vmem:[#allocation2 + $0x368] sm:$0xff]
        %v434 = vld [vmem:[#allocation2 + $0x370] sm:$0xff]
        %v435 = vld [vmem:[#allocation2 + $0x378] sm:$0xff]
        %v436 = vld [vmem:[#allocation2 + $0x380] sm:$0xff]
        %v437 = vld [vmem:[#allocation2 + $0x388] sm:$0xff]
        %v438 = vld [vmem:[#allocation2 + $0x390] sm:$0xff]
        %v439 = vld [vmem:[#allocation2 + $0x398] sm:$0xff]
        %v440 = vld [vmem:[#allocation2 + $0x3a0] sm:$0xff]
        %v441 = vld [vmem:[#allocation2 + $0x3a8] sm:$0xff]
        %v442 = vld [vmem:[#allocation2 + $0x3b0] sm:$0xff]
        %v443 = vld [vmem:[#allocation2 + $0x3b8] sm:$0xff]
        %v444 = vld [vmem:[#allocation2 + $0x3c0] sm:$0xff]
        %v445 = vld [vmem:[#allocation2 + $0x3c8] sm:$0xff]
        %v446 = vld [vmem:[#allocation2 + $0x3d0] sm:$0xff]
        %v447 = vld [vmem:[#allocation2 + $0x3d8] sm:$0xff]
        %v448 = vld [vmem:[#allocation2 + $0x3e0] sm:$0xff]
        %v449 = vld [vmem:[#allocation2 + $0x3e8] sm:$0xff]
        %v450 = vld [vmem:[#allocation2 + $0x3f0] sm:$0xff]
        %v451 = vld [vmem:[#allocation2 + $0x3f8] sm:$0xff]
        %v452 = vld [vmem:[#allocation2 + $0x400] sm:$0xff]
        %v453 = vld [vmem:[#allocation2 + $0x408] sm:$0xff]
        %v454 = vld [vmem:[#allocation2 + $0x410] sm:$0xff]
        %v455 = vld [vmem:[#allocation2 + $0x418] sm:$0xff]
        %v456 = vld [vmem:[#allocation2 + $0x420] sm:$0xff]
        %v457 = vld [vmem:[#allocation2 + $0x428] sm:$0xff]
        %v458 = vld [vmem:[#allocation2 + $0x430] sm:$0xff]
        %v459 = vld [vmem:[#allocation2 + $0x438] sm:$0xff]
        %v460 = vld [vmem:[#allocation2 + $0x440] sm:$0xff]
        %v461 = vld [vmem:[#allocation2 + $0x448] sm:$0xff]
        %v462 = vld [vmem:[#allocation2 + $0x450] sm:$0xff]
        %v463 = vld [vmem:[#allocation2 + $0x458] sm:$0xff]
        %v464 = vld [vmem:[#allocation2 + $0x460] sm:$0xff]
        %v465 = vld [vmem:[#allocation2 + $0x468] sm:$0xff]
        %v466 = vld [vmem:[#allocation2 + $0x470] sm:$0xff]
        %v467 = vld [vmem:[#allocation2 + $0x478] sm:$0xff]
        %v468 = vld [vmem:[#allocation2 + $0x480] sm:$0xff]
        %v469 = vld [vmem:[#allocation2 + $0x488] sm:$0xff]
        %v470 = vld [vmem:[#allocation2 + $0x490] sm:$0xff]
        %v471 = vld [vmem:[#allocation2 + $0x498] sm:$0xff]
        %v472 = vld [vmem:[#allocation2 + $0x4a0] sm:$0xff]
        %v473 = vld [vmem:[#allocation2 + $0x4a8] sm:$0xff]
        %v474 = vld [vmem:[#allocation2 + $0x4b0] sm:$0xff]
        %v475 = vld [vmem:[#allocation2 + $0x4b8] sm:$0xff]
        %v476 = vld [vmem:[#allocation2 + $0x4c0] sm:$0xff]
        %v477 = vld [vmem:[#allocation2 + $0x4c8] sm:$0xff]
        %v478 = vld [vmem:[#allocation2 + $0x4d0] sm:$0xff]
        %v479 = vld [vmem:[#allocation2 + $0x4d8] sm:$0xff]
        %v480 = vld [vmem:[#allocation2 + $0x4e0] sm:$0xff]
        %v481 = vld [vmem:[#allocation2 + $0x4e8] sm:$0xff]
        %v482 = vld [vmem:[#allocation2 + $0x4f0] sm:$0xff]
        %v483 = vld [vmem:[#allocation2 + $0x4f8] sm:$0xff]
        %v484 = vld [vmem:[#allocation2 + $0x500] sm:$0xff]
        %v485 = vld [vmem:[#allocation2 + $0x508] sm:$0xff]
        %v486 = vld [vmem:[#allocation2 + $0x510] sm:$0xff]
        %v487 = vld [vmem:[#allocation2 + $0x518] sm:$0xff]
        %v488 = vld [vmem:[#allocation2 + $0x520] sm:$0xff]
        %v489 = vld [vmem:[#allocation2 + $0x528] sm:$0xff]
        %v490 = vld [vmem:[#allocation2 + $0x530] sm:$0xff]
        %v491 = vld [vmem:[#allocation2 + $0x538] sm:$0xff]
        %v492 = vld [vmem:[#allocation2 + $0x540] sm:$0xff]
        %v493 = vld [vmem:[#allocation2 + $0x548] sm:$0xff]
        %v494 = vld [vmem:[#allocation2 + $0x550] sm:$0xff]
        %v495 = vld [vmem:[#allocation2 + $0x558] sm:$0xff]
        %v496 = vld [vmem:[#allocation2 + $0x560] sm:$0xff]
        %v497 = vld [vmem:[#allocation2 + $0x568] sm:$0xff]
        %v498 = vld [vmem:[#allocation2 + $0x570] sm:$0xff]
        %v499 = vld [vmem:[#allocation2 + $0x578] sm:$0xff]
        %v500 = vld [vmem:[#allocation2 + $0x580] sm:$0xff]
        %v501 = vld [vmem:[#allocation2 + $0x588] sm:$0xff]
        %v502 = vld [vmem:[#allocation2 + $0x590] sm:$0xff]
        %v503 = vld [vmem:[#allocation2 + $0x598] sm:$0xff]
        %v504 = vld [vmem:[#allocation2 + $0x5a0] sm:$0xff]
        %v505 = vld [vmem:[#allocation2 + $0x5a8] sm:$0xff]
        %v506 = vld [vmem:[#allocation2 + $0x5b0] sm:$0xff]
        %v507 = vld [vmem:[#allocation2 + $0x5b8] sm:$0xff]
        %v508 = vld [vmem:[#allocation2 + $0x5c0] sm:$0xff]
        %v509 = vld [vmem:[#allocation2 + $0x5c8] sm:$0xff]
        %v510 = vld [vmem:[#allocation2 + $0x5d0] sm:$0xff]
        %v511 = vld [vmem:[#allocation2 + $0x5d8] sm:$0xff]
        %v512 = vld [vmem:[#allocation2 + $0x5e0] sm:$0xff]
        %v513 = vld [vmem:[#allocation2 + $0x5e8] sm:$0xff]
        %v514 = vld [vmem:[#allocation2 + $0x5f0] sm:$0xff]
        %v515 = vld [vmem:[#allocation2 + $0x5f8] sm:$0xff]
        %v516 = vld [vmem:[#allocation2 + $0x600] sm:$0xff]
        %v517 = vld [vmem:[#allocation2 + $0x608] sm:$0xff]
        %v518 = vld [vmem:[#allocation2 + $0x610] sm:$0xff]
        %v519 = vld [vmem:[#allocation2 + $0x618] sm:$0xff]
        %v520 = vld [vmem:[#allocation2 + $0x620] sm:$0xff]
        %v521 = vld [vmem:[#allocation2 + $0x628] sm:$0xff]
        %v522 = vld [vmem:[#allocation2 + $0x630] sm:$0xff]
        %v523 = vld [vmem:[#allocation2 + $0x638] sm:$0xff]
        %v524 = vld [vmem:[#allocation2 + $0x640] sm:$0xff]
        %v525 = vld [vmem:[#allocation2 + $0x648] sm:$0xff]
        %v526 = vld [vmem:[#allocation2 + $0x650] sm:$0xff]
        %v527 = vld [vmem:[#allocation2 + $0x658] sm:$0xff]
        %v528 = vld [vmem:[#allocation2 + $0x660] sm:$0xff]
        %v529 = vld [vmem:[#allocation2 + $0x668] sm:$0xff]
        %v530 = vld [vmem:[#allocation2 + $0x670] sm:$0xff]
        %v531 = vld [vmem:[#allocation2 + $0x678] sm:$0xff]
        %v532 = vld [vmem:[#allocation2 + $0x680] sm:$0xff]
        %v533 = vld [vmem:[#allocation2 + $0x688] sm:$0xff]
        %v534 = vld [vmem:[#allocation2 + $0x690] sm:$0xff]
        %v535 = vld [vmem:[#allocation2 + $0x698] sm:$0xff]
        %v536 = vld [vmem:[#allocation2 + $0x6a0] sm:$0xff]
        %v537 = vld [vmem:[#allocation2 + $0x6a8] sm:$0xff]
        %v538 = vld [vmem:[#allocation2 + $0x6b0] sm:$0xff]
        %v539 = vld [vmem:[#allocation2 + $0x6b8] sm:$0xff]
        %v540 = vld [vmem:[#allocation2 + $0x6c0] sm:$0xff]
        %v541 = vld [vmem:[#allocation2 + $0x6c8] sm:$0xff]
        %v542 = vld [vmem:[#allocation2 + $0x6d0] sm:$0xff]
        %v543 = vld [vmem:[#allocation2 + $0x6d8] sm:$0xff]
        %v544 = vld [vmem:[#allocation2 + $0x6e0] sm:$0xff]
        %v545 = vld [vmem:[#allocation2 + $0x6e8] sm:$0xff]
        %v546 = vld [vmem:[#allocation2 + $0x6f0] sm:$0xff]
        %v547 = vld [vmem:[#allocation2 + $0x6f8] sm:$0xff]
        %v548 = vld [vmem:[%s2] sm:$0xf]
        %v550 = vlaneseq
        %v551 = vshrl.u32 %v550, 7
        %v552 = vsub.s32 0, %v551
        %v553 = vrot.slane %v548, %v552
        %v554 = vlaneseq
        %v555 = vshrl.u32 %v554, 7
        %v556 = vsub.s32 1, %v555
        %v557 = vrot.slane %v548, %v556
        %v558 = vlaneseq
        %v559 = vshrl.u32 %v558, 7
        %v560 = vsub.s32 2, %v559
        %v561 = vrot.slane %v548, %v560
        %v562 = vlaneseq
        %v563 = vshrl.u32 %v562, 7
        %v564 = vsub.s32 3, %v563
        %v565 = vrot.slane %v548, %v564
        %v578 = vunpack.c.l.b16 %v316
        %v579 = vunpack.c.h.b16 %v316
        %v580 = vunpack.c.l.b16 %v317
        %v581 = vunpack.c.h.b16 %v317
        %v582 = vunpack.c.l.b16 %v318
        %v583 = vunpack.c.h.b16 %v318
        %v584 = vunpack.c.l.b16 %v319
        %v585 = vunpack.c.l.b16 %v320
        %v586 = vunpack.c.h.b16 %v320
        %v587 = vunpack.c.l.b16 %v321
        %v588 = vunpack.c.h.b16 %v321
        %v589 = vunpack.c.l.b16 %v322
        %v590 = vunpack.c.h.b16 %v322
        %v591 = vunpack.c.l.b16 %v323
        %v592 = vpack.c.b16 %v585, %v578
        %v593 = vpack.c.b16 %v586, %v579
        %v594 = vpack.c.b16 %v587, %v580
        %v595 = vpack.c.b16 %v588, %v581
        %v596 = vpack.c.b16 %v589, %v582
        %v597 = vpack.c.b16 %v590, %v583
        %v598 = vpack.c.b16 %v591, %v584
        %v830 = vunpack.c.l.b16 %v324
        %v831 = vunpack.c.h.b16 %v324
        %v832 = vunpack.c.l.b16 %v325
        %v833 = vunpack.c.h.b16 %v325
        %v834 = vunpack.c.l.b16 %v326
        %v835 = vunpack.c.h.b16 %v326
        %v836 = vunpack.c.l.b16 %v327
        %v837 = vunpack.c.h.b16 %v327
        %v838 = vunpack.c.l.b16 %v328
        %v839 = vunpack.c.h.b16 %v328
        %v840 = vunpack.c.l.b16 %v329
        %v841 = vunpack.c.h.b16 %v329
        %v842 = vunpack.c.l.b16 %v330
        %v843 = vunpack.c.h.b16 %v330
        %v844 = vunpack.c.l.b16 %v331
        %v845 = vunpack.c.h.b16 %v331
        %v846 = vunpack.c.l.b16 %v332
        %v847 = vunpack.c.h.b16 %v332
        %v848 = vunpack.c.l.b16 %v333
        %v849 = vunpack.c.h.b16 %v333
        %v850 = vunpack.c.l.b16 %v334
        %v851 = vunpack.c.h.b16 %v334
        %v852 = vunpack.c.l.b16 %v335
        %v853 = vunpack.c.h.b16 %v335
        %v854 = vunpack.c.l.b16 %v336
        %v855 = vunpack.c.h.b16 %v336
        %v856 = vunpack.c.l.b16 %v337
        %v857 = vunpack.c.h.b16 %v337
        %v858 = vunpack.c.l.b16 %v338
        %v859 = vunpack.c.h.b16 %v338
        %v860 = vunpack.c.l.b16 %v339
        %v861 = vunpack.c.h.b16 %v339
        %v862 = vunpack.c.l.b16 %v340
        %v863 = vunpack.c.h.b16 %v340
        %v864 = vunpack.c.l.b16 %v341
        %v865 = vunpack.c.h.b16 %v341
        %v866 = vunpack.c.l.b16 %v342
        %v867 = vunpack.c.h.b16 %v342
        %v868 = vunpack.c.l.b16 %v343
        %v869 = vunpack.c.h.b16 %v343
        %v870 = vunpack.c.l.b16 %v344
        %v871 = vunpack.c.h.b16 %v344
        %v872 = vunpack.c.l.b16 %v345
        %v873 = vunpack.c.h.b16 %v345
        %v874 = vunpack.c.l.b16 %v346
        %v875 = vunpack.c.h.b16 %v346
        %v876 = vunpack.c.l.b16 %v347
        %v877 = vunpack.c.h.b16 %v347
        %v878 = vunpack.c.l.b16 %v348
        %v879 = vunpack.c.h.b16 %v348
        %v880 = vunpack.c.l.b16 %v349
        %v881 = vunpack.c.h.b16 %v349
        %v882 = vunpack.c.l.b16 %v350
        %v883 = vunpack.c.h.b16 %v350
        %v884 = vunpack.c.l.b16 %v351
        %v885 = vunpack.c.h.b16 %v351
        %v886 = vunpack.c.l.b16 %v352
        %v887 = vunpack.c.h.b16 %v352
        %v888 = vunpack.c.l.b16 %v353
        %v889 = vunpack.c.h.b16 %v353
        %v890 = vunpack.c.l.b16 %v354
        %v891 = vunpack.c.h.b16 %v354
        %v892 = vunpack.c.l.b16 %v355
        %v893 = vunpack.c.h.b16 %v355
        %v894 = vunpack.c.l.b16 %v356
        %v895 = vunpack.c.h.b16 %v356
        %v896 = vunpack.c.l.b16 %v357
        %v897 = vunpack.c.h.b16 %v357
        %v898 = vunpack.c.l.b16 %v358
        %v899 = vunpack.c.h.b16 %v358
        %v900 = vunpack.c.l.b16 %v359
        %v901 = vunpack.c.h.b16 %v359
        %v902 = vunpack.c.l.b16 %v360
        %v903 = vunpack.c.h.b16 %v360
        %v904 = vunpack.c.l.b16 %v361
        %v905 = vunpack.c.h.b16 %v361
        %v906 = vunpack.c.l.b16 %v362
        %v907 = vunpack.c.h.b16 %v362
        %v908 = vunpack.c.l.b16 %v363
        %v909 = vunpack.c.h.b16 %v363
        %v910 = vunpack.c.l.b16 %v364
        %v911 = vunpack.c.h.b16 %v364
        %v912 = vunpack.c.l.b16 %v365
        %v913 = vunpack.c.h.b16 %v365
        %v914 = vunpack.c.l.b16 %v366
        %v915 = vunpack.c.h.b16 %v366
        %v916 = vunpack.c.l.b16 %v367
        %v917 = vunpack.c.h.b16 %v367
        %v918 = vunpack.c.l.b16 %v368
        %v919 = vunpack.c.h.b16 %v368
        %v920 = vunpack.c.l.b16 %v369
        %v921 = vunpack.c.h.b16 %v369
        %v922 = vunpack.c.l.b16 %v370
        %v923 = vunpack.c.h.b16 %v370
        %v924 = vunpack.c.l.b16 %v371
        %v925 = vunpack.c.h.b16 %v371
        %v926 = vunpack.c.l.b16 %v372
        %v927 = vunpack.c.h.b16 %v372
        %v928 = vunpack.c.l.b16 %v373
        %v929 = vunpack.c.h.b16 %v373
        %v930 = vunpack.c.l.b16 %v374
        %v931 = vunpack.c.h.b16 %v374
        %v932 = vunpack.c.l.b16 %v375
        %v933 = vunpack.c.h.b16 %v375
        %v934 = vunpack.c.l.b16 %v376
        %v935 = vunpack.c.h.b16 %v376
        %v936 = vunpack.c.l.b16 %v377
        %v937 = vunpack.c.h.b16 %v377
        %v938 = vunpack.c.l.b16 %v378
        %v939 = vunpack.c.h.b16 %v378
        %v940 = vunpack.c.l.b16 %v379
        %v941 = vunpack.c.h.b16 %v379
        %v942 = vunpack.c.l.b16 %v380
        %v943 = vunpack.c.h.b16 %v380
        %v944 = vunpack.c.l.b16 %v381
        %v945 = vunpack.c.h.b16 %v381
        %v946 = vunpack.c.l.b16 %v382
        %v947 = vunpack.c.h.b16 %v382
        %v948 = vunpack.c.l.b16 %v383
        %v949 = vunpack.c.h.b16 %v383
        %v950 = vunpack.c.l.b16 %v384
        %v951 = vunpack.c.h.b16 %v384
        %v952 = vunpack.c.l.b16 %v385
        %v953 = vunpack.c.h.b16 %v385
        %v954 = vunpack.c.l.b16 %v386
        %v955 = vunpack.c.h.b16 %v386
        %v956 = vunpack.c.l.b16 %v387
        %v957 = vunpack.c.h.b16 %v387
        %v958 = vunpack.c.l.b16 %v388
        %v959 = vunpack.c.h.b16 %v388
        %v960 = vunpack.c.l.b16 %v389
        %v961 = vunpack.c.h.b16 %v389
        %v962 = vunpack.c.l.b16 %v390
        %v963 = vunpack.c.h.b16 %v390
        %v964 = vunpack.c.l.b16 %v391
        %v965 = vunpack.c.h.b16 %v391
        %v966 = vunpack.c.l.b16 %v392
        %v967 = vunpack.c.h.b16 %v392
        %v968 = vunpack.c.l.b16 %v393
        %v969 = vunpack.c.h.b16 %v393
        %v970 = vunpack.c.l.b16 %v394
        %v971 = vunpack.c.h.b16 %v394
        %v972 = vunpack.c.l.b16 %v395
        %v973 = vunpack.c.h.b16 %v395
        %v974 = vunpack.c.l.b16 %v396
        %v975 = vunpack.c.h.b16 %v396
        %v976 = vunpack.c.l.b16 %v397
        %v977 = vunpack.c.h.b16 %v397
        %v978 = vunpack.c.l.b16 %v398
        %v979 = vunpack.c.h.b16 %v398
        %v980 = vunpack.c.l.b16 %v399
        %v981 = vunpack.c.h.b16 %v399
        %v982 = vunpack.c.l.b16 %v400
        %v983 = vunpack.c.h.b16 %v400
        %v984 = vunpack.c.l.b16 %v401
        %v985 = vunpack.c.h.b16 %v401
        %v986 = vunpack.c.l.b16 %v402
        %v987 = vunpack.c.h.b16 %v402
        %v988 = vunpack.c.l.b16 %v403
        %v989 = vunpack.c.h.b16 %v403
        %v990 = vunpack.c.l.b16 %v404
        %v991 = vunpack.c.h.b16 %v404
        %v992 = vunpack.c.l.b16 %v405
        %v993 = vunpack.c.h.b16 %v405
        %v994 = vunpack.c.l.b16 %v406
        %v995 = vunpack.c.h.b16 %v406
        %v996 = vunpack.c.l.b16 %v407
        %v997 = vunpack.c.h.b16 %v407
        %v998 = vunpack.c.l.b16 %v408
        %v999 = vunpack.c.h.b16 %v408
        %v1000 = vunpack.c.l.b16 %v409
        %v1001 = vunpack.c.h.b16 %v409
        %v1002 = vunpack.c.l.b16 %v410
        %v1003 = vunpack.c.h.b16 %v410
        %v1004 = vunpack.c.l.b16 %v411
        %v1005 = vunpack.c.h.b16 %v411
        %v1006 = vunpack.c.l.b16 %v412
        %v1007 = vunpack.c.h.b16 %v412
        %v1008 = vunpack.c.l.b16 %v413
        %v1009 = vunpack.c.h.b16 %v413
        %v1010 = vunpack.c.l.b16 %v414
        %v1011 = vunpack.c.h.b16 %v414
        %v1012 = vunpack.c.l.b16 %v415
        %v1013 = vunpack.c.h.b16 %v415
        %v1014 = vunpack.c.l.b16 %v416
        %v1015 = vunpack.c.h.b16 %v416
        %v1016 = vunpack.c.l.b16 %v417
        %v1017 = vunpack.c.h.b16 %v417
        %v1018 = vunpack.c.l.b16 %v418
        %v1019 = vunpack.c.h.b16 %v418
        %v1020 = vunpack.c.l.b16 %v419
        %v1021 = vunpack.c.h.b16 %v419
        %v1022 = vunpack.c.l.b16 %v420
        %v1023 = vunpack.c.h.b16 %v420
        %v1024 = vunpack.c.l.b16 %v421
        %v1025 = vunpack.c.h.b16 %v421
        %v1026 = vunpack.c.l.b16 %v422
        %v1027 = vunpack.c.h.b16 %v422
        %v1028 = vunpack.c.l.b16 %v423
        %v1029 = vunpack.c.h.b16 %v423
        %v1030 = vunpack.c.l.b16 %v424
        %v1031 = vunpack.c.h.b16 %v424
        %v1032 = vunpack.c.l.b16 %v425
        %v1033 = vunpack.c.h.b16 %v425
        %v1034 = vunpack.c.l.b16 %v426
        %v1035 = vunpack.c.h.b16 %v426
        %v1036 = vunpack.c.l.b16 %v427
        %v1037 = vunpack.c.h.b16 %v427
        %v1038 = vunpack.c.l.b16 %v428
        %v1039 = vunpack.c.h.b16 %v428
        %v1040 = vunpack.c.l.b16 %v429
        %v1041 = vunpack.c.h.b16 %v429
        %v1042 = vunpack.c.l.b16 %v430
        %v1043 = vunpack.c.h.b16 %v430
        %v1044 = vunpack.c.l.b16 %v431
        %v1045 = vunpack.c.h.b16 %v431
        %v1046 = vunpack.c.l.b16 %v432
        %v1047 = vunpack.c.h.b16 %v432
        %v1048 = vunpack.c.l.b16 %v433
        %v1049 = vunpack.c.h.b16 %v433
        %v1050 = vunpack.c.l.b16 %v434
        %v1051 = vunpack.c.h.b16 %v434
        %v1052 = vunpack.c.l.b16 %v435
        %v1053 = vunpack.c.h.b16 %v435
        %v1054 = vunpack.c.l.b16 %v436
        %v1055 = vunpack.c.h.b16 %v436
        %v1056 = vunpack.c.l.b16 %v437
        %v1057 = vunpack.c.h.b16 %v437
        %v1058 = vunpack.c.l.b16 %v438
        %v1059 = vunpack.c.h.b16 %v438
        %v1060 = vunpack.c.l.b16 %v439
        %v1061 = vunpack.c.h.b16 %v439
        %v1062 = vunpack.c.l.b16 %v440
        %v1063 = vunpack.c.h.b16 %v440
        %v1064 = vunpack.c.l.b16 %v441
        %v1065 = vunpack.c.h.b16 %v441
        %v1066 = vunpack.c.l.b16 %v442
        %v1067 = vunpack.c.h.b16 %v442
        %v1068 = vunpack.c.l.b16 %v443
        %v1069 = vunpack.c.h.b16 %v443
        %v1070 = vunpack.c.l.b16 %v444
        %v1071 = vunpack.c.h.b16 %v444
        %v1072 = vunpack.c.l.b16 %v445
        %v1073 = vunpack.c.h.b16 %v445
        %v1074 = vunpack.c.l.b16 %v446
        %v1075 = vunpack.c.h.b16 %v446
        %v1076 = vunpack.c.l.b16 %v447
        %v1077 = vunpack.c.h.b16 %v447
        %v1078 = vunpack.c.l.b16 %v448
        %v1079 = vunpack.c.h.b16 %v448
        %v1080 = vunpack.c.l.b16 %v449
        %v1081 = vunpack.c.h.b16 %v449
        %v1082 = vunpack.c.l.b16 %v450
        %v1083 = vunpack.c.h.b16 %v450
        %v1084 = vunpack.c.l.b16 %v451
        %v1085 = vunpack.c.h.b16 %v451
        %v1086 = vunpack.c.l.b16 %v452
        %v1087 = vunpack.c.h.b16 %v452
        %v1088 = vunpack.c.l.b16 %v453
        %v1089 = vunpack.c.h.b16 %v453
        %v1090 = vunpack.c.l.b16 %v454
        %v1091 = vunpack.c.h.b16 %v454
        %v1092 = vunpack.c.l.b16 %v455
        %v1093 = vunpack.c.h.b16 %v455
        %v1094 = vunpack.c.l.b16 %v456
        %v1095 = vunpack.c.h.b16 %v456
        %v1096 = vunpack.c.l.b16 %v457
        %v1097 = vunpack.c.h.b16 %v457
        %v1098 = vunpack.c.l.b16 %v458
        %v1099 = vunpack.c.h.b16 %v458
        %v1100 = vunpack.c.l.b16 %v459
        %v1101 = vunpack.c.h.b16 %v459
        %v1102 = vunpack.c.l.b16 %v460
        %v1103 = vunpack.c.h.b16 %v460
        %v1104 = vunpack.c.l.b16 %v461
        %v1105 = vunpack.c.h.b16 %v461
        %v1106 = vunpack.c.l.b16 %v462
        %v1107 = vunpack.c.h.b16 %v462
        %v1108 = vunpack.c.l.b16 %v463
        %v1109 = vunpack.c.h.b16 %v463
        %v1110 = vunpack.c.l.b16 %v464
        %v1111 = vunpack.c.h.b16 %v464
        %v1112 = vunpack.c.l.b16 %v465
        %v1113 = vunpack.c.h.b16 %v465
        %v1114 = vunpack.c.l.b16 %v466
        %v1115 = vunpack.c.h.b16 %v466
        %v1116 = vunpack.c.l.b16 %v467
        %v1117 = vunpack.c.h.b16 %v467
        %v1118 = vunpack.c.l.b16 %v468
        %v1119 = vunpack.c.h.b16 %v468
        %v1120 = vunpack.c.l.b16 %v469
        %v1121 = vunpack.c.h.b16 %v469
        %v1122 = vunpack.c.l.b16 %v470
        %v1123 = vunpack.c.h.b16 %v470
        %v1124 = vunpack.c.l.b16 %v471
        %v1125 = vunpack.c.h.b16 %v471
        %v1126 = vunpack.c.l.b16 %v472
        %v1127 = vunpack.c.h.b16 %v472
        %v1128 = vunpack.c.l.b16 %v473
        %v1129 = vunpack.c.h.b16 %v473
        %v1130 = vunpack.c.l.b16 %v474
        %v1131 = vunpack.c.h.b16 %v474
        %v1132 = vunpack.c.l.b16 %v475
        %v1133 = vunpack.c.h.b16 %v475
        %v1134 = vunpack.c.l.b16 %v476
        %v1135 = vunpack.c.h.b16 %v476
        %v1136 = vunpack.c.l.b16 %v477
        %v1137 = vunpack.c.h.b16 %v477
        %v1138 = vunpack.c.l.b16 %v478
        %v1139 = vunpack.c.h.b16 %v478
        %v1140 = vunpack.c.l.b16 %v479
        %v1141 = vunpack.c.h.b16 %v479
        %v1142 = vunpack.c.l.b16 %v480
        %v1143 = vunpack.c.h.b16 %v480
        %v1144 = vunpack.c.l.b16 %v481
        %v1145 = vunpack.c.h.b16 %v481
        %v1146 = vunpack.c.l.b16 %v482
        %v1147 = vunpack.c.h.b16 %v482
        %v1148 = vunpack.c.l.b16 %v483
        %v1149 = vunpack.c.h.b16 %v483
        %v1150 = vunpack.c.l.b16 %v484
        %v1151 = vunpack.c.h.b16 %v484
        %v1152 = vunpack.c.l.b16 %v485
        %v1153 = vunpack.c.h.b16 %v485
        %v1154 = vunpack.c.l.b16 %v486
        %v1155 = vunpack.c.h.b16 %v486
        %v1156 = vunpack.c.l.b16 %v487
        %v1157 = vunpack.c.h.b16 %v487
        %v1158 = vunpack.c.l.b16 %v488
        %v1159 = vunpack.c.h.b16 %v488
        %v1160 = vunpack.c.l.b16 %v489
        %v1161 = vunpack.c.h.b16 %v489
        %v1162 = vunpack.c.l.b16 %v490
        %v1163 = vunpack.c.h.b16 %v490
        %v1164 = vunpack.c.l.b16 %v491
        %v1165 = vunpack.c.h.b16 %v491
        %v1166 = vunpack.c.l.b16 %v492
        %v1167 = vunpack.c.h.b16 %v492
        %v1168 = vunpack.c.l.b16 %v493
        %v1169 = vunpack.c.h.b16 %v493
        %v1170 = vunpack.c.l.b16 %v494
        %v1171 = vunpack.c.h.b16 %v494
        %v1172 = vunpack.c.l.b16 %v495
        %v1173 = vunpack.c.h.b16 %v495
        %v1174 = vunpack.c.l.b16 %v496
        %v1175 = vunpack.c.h.b16 %v496
        %v1176 = vunpack.c.l.b16 %v497
        %v1177 = vunpack.c.h.b16 %v497
        %v1178 = vunpack.c.l.b16 %v498
        %v1179 = vunpack.c.h.b16 %v498
        %v1180 = vunpack.c.l.b16 %v499
        %v1181 = vunpack.c.h.b16 %v499
        %v1182 = vunpack.c.l.b16 %v500
        %v1183 = vunpack.c.h.b16 %v500
        %v1184 = vunpack.c.l.b16 %v501
        %v1185 = vunpack.c.h.b16 %v501
        %v1186 = vunpack.c.l.b16 %v502
        %v1187 = vunpack.c.h.b16 %v502
        %v1188 = vunpack.c.l.b16 %v503
        %v1189 = vunpack.c.h.b16 %v503
        %v1190 = vunpack.c.l.b16 %v504
        %v1191 = vunpack.c.h.b16 %v504
        %v1192 = vunpack.c.l.b16 %v505
        %v1193 = vunpack.c.h.b16 %v505
        %v1194 = vunpack.c.l.b16 %v506
        %v1195 = vunpack.c.h.b16 %v506
        %v1196 = vunpack.c.l.b16 %v507
        %v1197 = vunpack.c.h.b16 %v507
        %v1198 = vunpack.c.l.b16 %v508
        %v1199 = vunpack.c.h.b16 %v508
        %v1200 = vunpack.c.l.b16 %v509
        %v1201 = vunpack.c.h.b16 %v509
        %v1202 = vunpack.c.l.b16 %v510
        %v1203 = vunpack.c.h.b16 %v510
        %v1204 = vunpack.c.l.b16 %v511
        %v1205 = vunpack.c.h.b16 %v511
        %v1206 = vunpack.c.l.b16 %v512
        %v1207 = vunpack.c.h.b16 %v512
        %v1208 = vunpack.c.l.b16 %v513
        %v1209 = vunpack.c.h.b16 %v513
        %v1210 = vunpack.c.l.b16 %v514
        %v1211 = vunpack.c.h.b16 %v514
        %v1212 = vunpack.c.l.b16 %v515
        %v1213 = vunpack.c.h.b16 %v515
        %v1214 = vunpack.c.l.b16 %v516
        %v1215 = vunpack.c.h.b16 %v516
        %v1216 = vunpack.c.l.b16 %v517
        %v1217 = vunpack.c.h.b16 %v517
        %v1218 = vunpack.c.l.b16 %v518
        %v1219 = vunpack.c.h.b16 %v518
        %v1220 = vunpack.c.l.b16 %v519
        %v1221 = vunpack.c.h.b16 %v519
        %v1222 = vunpack.c.l.b16 %v520
        %v1223 = vunpack.c.h.b16 %v520
        %v1224 = vunpack.c.l.b16 %v521
        %v1225 = vunpack.c.h.b16 %v521
        %v1226 = vunpack.c.l.b16 %v522
        %v1227 = vunpack.c.h.b16 %v522
        %v1228 = vunpack.c.l.b16 %v523
        %v1229 = vunpack.c.h.b16 %v523
        %v1230 = vunpack.c.l.b16 %v524
        %v1231 = vunpack.c.h.b16 %v524
        %v1232 = vunpack.c.l.b16 %v525
        %v1233 = vunpack.c.h.b16 %v525
        %v1234 = vunpack.c.l.b16 %v526
        %v1235 = vunpack.c.h.b16 %v526
        %v1236 = vunpack.c.l.b16 %v527
        %v1237 = vunpack.c.h.b16 %v527
        %v1238 = vunpack.c.l.b16 %v528
        %v1239 = vunpack.c.h.b16 %v528
        %v1240 = vunpack.c.l.b16 %v529
        %v1241 = vunpack.c.h.b16 %v529
        %v1242 = vunpack.c.l.b16 %v530
        %v1243 = vunpack.c.h.b16 %v530
        %v1244 = vunpack.c.l.b16 %v531
        %v1245 = vunpack.c.h.b16 %v531
        %v1246 = vunpack.c.l.b16 %v532
        %v1247 = vunpack.c.h.b16 %v532
        %v1248 = vunpack.c.l.b16 %v533
        %v1249 = vunpack.c.h.b16 %v533
        %v1250 = vunpack.c.l.b16 %v534
        %v1251 = vunpack.c.h.b16 %v534
        %v1252 = vunpack.c.l.b16 %v535
        %v1253 = vunpack.c.h.b16 %v535
        %v1254 = vunpack.c.l.b16 %v536
        %v1255 = vunpack.c.h.b16 %v536
        %v1256 = vunpack.c.l.b16 %v537
        %v1257 = vunpack.c.h.b16 %v537
        %v1258 = vunpack.c.l.b16 %v538
        %v1259 = vunpack.c.h.b16 %v538
        %v1260 = vunpack.c.l.b16 %v539
        %v1261 = vunpack.c.h.b16 %v539
        %v1262 = vunpack.c.l.b16 %v540
        %v1263 = vunpack.c.h.b16 %v540
        %v1264 = vunpack.c.l.b16 %v541
        %v1265 = vunpack.c.h.b16 %v541
        %v1266 = vunpack.c.l.b16 %v542
        %v1267 = vunpack.c.h.b16 %v542
        %v1268 = vunpack.c.l.b16 %v543
        %v1269 = vunpack.c.h.b16 %v543
        %v1270 = vunpack.c.l.b16 %v544
        %v1271 = vunpack.c.h.b16 %v544
        %v1272 = vunpack.c.l.b16 %v545
        %v1273 = vunpack.c.h.b16 %v545
        %v1274 = vunpack.c.l.b16 %v546
        %v1275 = vunpack.c.h.b16 %v546
        %v1276 = vunpack.c.l.b16 %v547
        %v1277 = vunpack.c.h.b16 %v547
        %v1278 = vpack.c.b16 %v834, %v830
        %v1279 = vpack.c.b16 %v835, %v831
        %v1280 = vpack.c.b16 %v836, %v832
        %v1281 = vpack.c.b16 %v837, %v833
        %v1282 = vpack.c.b16 %v842, %v838
        %v1283 = vpack.c.b16 %v843, %v839
        %v1284 = vpack.c.b16 %v844, %v840
        %v1285 = vpack.c.b16 %v845, %v841
        %v1286 = vpack.c.b16 %v850, %v846
        %v1287 = vpack.c.b16 %v851, %v847
        %v1288 = vpack.c.b16 %v852, %v848
        %v1289 = vpack.c.b16 %v853, %v849
        %v1290 = vpack.c.b16 %v858, %v854
        %v1291 = vpack.c.b16 %v859, %v855
        %v1292 = vpack.c.b16 %v860, %v856
        %v1293 = vpack.c.b16 %v861, %v857
        %v1294 = vpack.c.b16 %v866, %v862
        %v1295 = vpack.c.b16 %v867, %v863
        %v1296 = vpack.c.b16 %v868, %v864
        %v1297 = vpack.c.b16 %v869, %v865
        %v1298 = vpack.c.b16 %v874, %v870
        %v1299 = vpack.c.b16 %v875, %v871
        %v1300 = vpack.c.b16 %v876, %v872
        %v1301 = vpack.c.b16 %v877, %v873
        %v1302 = vpack.c.b16 %v882, %v878
        %v1303 = vpack.c.b16 %v883, %v879
        %v1304 = vpack.c.b16 %v884, %v880
        %v1305 = vpack.c.b16 %v885, %v881
        %v1306 = vpack.c.b16 %v890, %v886
        %v1307 = vpack.c.b16 %v891, %v887
        %v1308 = vpack.c.b16 %v892, %v888
        %v1309 = vpack.c.b16 %v893, %v889
        %v1310 = vpack.c.b16 %v898, %v894
        %v1311 = vpack.c.b16 %v899, %v895
        %v1312 = vpack.c.b16 %v900, %v896
        %v1313 = vpack.c.b16 %v901, %v897
        %v1314 = vpack.c.b16 %v906, %v902
        %v1315 = vpack.c.b16 %v907, %v903
        %v1316 = vpack.c.b16 %v908, %v904
        %v1317 = vpack.c.b16 %v909, %v905
        %v1318 = vpack.c.b16 %v914, %v910
        %v1319 = vpack.c.b16 %v915, %v911
        %v1320 = vpack.c.b16 %v916, %v912
        %v1321 = vpack.c.b16 %v917, %v913
        %v1322 = vpack.c.b16 %v922, %v918
        %v1323 = vpack.c.b16 %v923, %v919
        %v1324 = vpack.c.b16 %v924, %v920
        %v1325 = vpack.c.b16 %v925, %v921
        %v1326 = vpack.c.b16 %v930, %v926
        %v1327 = vpack.c.b16 %v931, %v927
        %v1328 = vpack.c.b16 %v932, %v928
        %v1329 = vpack.c.b16 %v933, %v929
        %v1330 = vpack.c.b16 %v938, %v934
        %v1331 = vpack.c.b16 %v939, %v935
        %v1332 = vpack.c.b16 %v940, %v936
        %v1333 = vpack.c.b16 %v941, %v937
        %v1334 = vpack.c.b16 %v946, %v942
        %v1335 = vpack.c.b16 %v947, %v943
        %v1336 = vpack.c.b16 %v948, %v944
        %v1337 = vpack.c.b16 %v949, %v945
        %v1338 = vpack.c.b16 %v954, %v950
        %v1339 = vpack.c.b16 %v955, %v951
        %v1340 = vpack.c.b16 %v956, %v952
        %v1341 = vpack.c.b16 %v957, %v953
        %v1342 = vpack.c.b16 %v962, %v958
        %v1343 = vpack.c.b16 %v963, %v959
        %v1344 = vpack.c.b16 %v964, %v960
        %v1345 = vpack.c.b16 %v965, %v961
        %v1346 = vpack.c.b16 %v970, %v966
        %v1347 = vpack.c.b16 %v971, %v967
        %v1348 = vpack.c.b16 %v972, %v968
        %v1349 = vpack.c.b16 %v973, %v969
        %v1350 = vpack.c.b16 %v978, %v974
        %v1351 = vpack.c.b16 %v979, %v975
        %v1352 = vpack.c.b16 %v980, %v976
        %v1353 = vpack.c.b16 %v981, %v977
        %v1354 = vpack.c.b16 %v986, %v982
        %v1355 = vpack.c.b16 %v987, %v983
        %v1356 = vpack.c.b16 %v988, %v984
        %v1357 = vpack.c.b16 %v989, %v985
        %v1358 = vpack.c.b16 %v994, %v990
        %v1359 = vpack.c.b16 %v995, %v991
        %v1360 = vpack.c.b16 %v996, %v992
        %v1361 = vpack.c.b16 %v997, %v993
        %v1362 = vpack.c.b16 %v1002, %v998
        %v1363 = vpack.c.b16 %v1003, %v999
        %v1364 = vpack.c.b16 %v1004, %v1000
        %v1365 = vpack.c.b16 %v1005, %v1001
        %v1366 = vpack.c.b16 %v1010, %v1006
        %v1367 = vpack.c.b16 %v1011, %v1007
        %v1368 = vpack.c.b16 %v1012, %v1008
        %v1369 = vpack.c.b16 %v1013, %v1009
        %v1370 = vpack.c.b16 %v1018, %v1014
        %v1371 = vpack.c.b16 %v1019, %v1015
        %v1372 = vpack.c.b16 %v1020, %v1016
        %v1373 = vpack.c.b16 %v1021, %v1017
        %v1374 = vpack.c.b16 %v1026, %v1022
        %v1375 = vpack.c.b16 %v1027, %v1023
        %v1376 = vpack.c.b16 %v1028, %v1024
        %v1377 = vpack.c.b16 %v1029, %v1025
        %v1378 = vpack.c.b16 %v1034, %v1030
        %v1379 = vpack.c.b16 %v1035, %v1031
        %v1380 = vpack.c.b16 %v1036, %v1032
        %v1381 = vpack.c.b16 %v1037, %v1033
        %v1382 = vpack.c.b16 %v1042, %v1038
        %v1383 = vpack.c.b16 %v1043, %v1039
        %v1384 = vpack.c.b16 %v1044, %v1040
        %v1385 = vpack.c.b16 %v1045, %v1041
        %v1386 = vpack.c.b16 %v1050, %v1046
        %v1387 = vpack.c.b16 %v1051, %v1047
        %v1388 = vpack.c.b16 %v1052, %v1048
        %v1389 = vpack.c.b16 %v1053, %v1049
        %v1390 = vpack.c.b16 %v1058, %v1054
        %v1391 = vpack.c.b16 %v1059, %v1055
        %v1392 = vpack.c.b16 %v1060, %v1056
        %v1393 = vpack.c.b16 %v1061, %v1057
        %v1394 = vpack.c.b16 %v1066, %v1062
        %v1395 = vpack.c.b16 %v1067, %v1063
        %v1396 = vpack.c.b16 %v1068, %v1064
        %v1397 = vpack.c.b16 %v1069, %v1065
        %v1398 = vpack.c.b16 %v1074, %v1070
        %v1399 = vpack.c.b16 %v1075, %v1071
        %v1400 = vpack.c.b16 %v1076, %v1072
        %v1401 = vpack.c.b16 %v1077, %v1073
        %v1402 = vpack.c.b16 %v1082, %v1078
        %v1403 = vpack.c.b16 %v1083, %v1079
        %v1404 = vpack.c.b16 %v1084, %v1080
        %v1405 = vpack.c.b16 %v1085, %v1081
        %v1406 = vpack.c.b16 %v1090, %v1086
        %v1407 = vpack.c.b16 %v1091, %v1087
        %v1408 = vpack.c.b16 %v1092, %v1088
        %v1409 = vpack.c.b16 %v1093, %v1089
        %v1410 = vpack.c.b16 %v1098, %v1094
        %v1411 = vpack.c.b16 %v1099, %v1095
        %v1412 = vpack.c.b16 %v1100, %v1096
        %v1413 = vpack.c.b16 %v1101, %v1097
        %v1414 = vpack.c.b16 %v1106, %v1102
        %v1415 = vpack.c.b16 %v1107, %v1103
        %v1416 = vpack.c.b16 %v1108, %v1104
        %v1417 = vpack.c.b16 %v1109, %v1105
        %v1418 = vpack.c.b16 %v1114, %v1110
        %v1419 = vpack.c.b16 %v1115, %v1111
        %v1420 = vpack.c.b16 %v1116, %v1112
        %v1421 = vpack.c.b16 %v1117, %v1113
        %v1422 = vpack.c.b16 %v1122, %v1118
        %v1423 = vpack.c.b16 %v1123, %v1119
        %v1424 = vpack.c.b16 %v1124, %v1120
        %v1425 = vpack.c.b16 %v1125, %v1121
        %v1426 = vpack.c.b16 %v1130, %v1126
        %v1427 = vpack.c.b16 %v1131, %v1127
        %v1428 = vpack.c.b16 %v1132, %v1128
        %v1429 = vpack.c.b16 %v1133, %v1129
        %v1430 = vpack.c.b16 %v1138, %v1134
        %v1431 = vpack.c.b16 %v1139, %v1135
        %v1432 = vpack.c.b16 %v1140, %v1136
        %v1433 = vpack.c.b16 %v1141, %v1137
        %v1434 = vpack.c.b16 %v1146, %v1142
        %v1435 = vpack.c.b16 %v1147, %v1143
        %v1436 = vpack.c.b16 %v1148, %v1144
        %v1437 = vpack.c.b16 %v1149, %v1145
        %v1438 = vpack.c.b16 %v1154, %v1150
        %v1439 = vpack.c.b16 %v1155, %v1151
        %v1440 = vpack.c.b16 %v1156, %v1152
        %v1441 = vpack.c.b16 %v1157, %v1153
        %v1442 = vpack.c.b16 %v1162, %v1158
        %v1443 = vpack.c.b16 %v1163, %v1159
        %v1444 = vpack.c.b16 %v1164, %v1160
        %v1445 = vpack.c.b16 %v1165, %v1161
        %v1446 = vpack.c.b16 %v1170, %v1166
        %v1447 = vpack.c.b16 %v1171, %v1167
        %v1448 = vpack.c.b16 %v1172, %v1168
        %v1449 = vpack.c.b16 %v1173, %v1169
        %v1450 = vpack.c.b16 %v1178, %v1174
        %v1451 = vpack.c.b16 %v1179, %v1175
        %v1452 = vpack.c.b16 %v1180, %v1176
        %v1453 = vpack.c.b16 %v1181, %v1177
        %v1454 = vpack.c.b16 %v1186, %v1182
        %v1455 = vpack.c.b16 %v1187, %v1183
        %v1456 = vpack.c.b16 %v1188, %v1184
        %v1457 = vpack.c.b16 %v1189, %v1185
        %v1458 = vpack.c.b16 %v1194, %v1190
        %v1459 = vpack.c.b16 %v1195, %v1191
        %v1460 = vpack.c.b16 %v1196, %v1192
        %v1461 = vpack.c.b16 %v1197, %v1193
        %v1462 = vpack.c.b16 %v1202, %v1198
        %v1463 = vpack.c.b16 %v1203, %v1199
        %v1464 = vpack.c.b16 %v1204, %v1200
        %v1465 = vpack.c.b16 %v1205, %v1201
        %v1466 = vpack.c.b16 %v1210, %v1206
        %v1467 = vpack.c.b16 %v1211, %v1207
        %v1468 = vpack.c.b16 %v1212, %v1208
        %v1469 = vpack.c.b16 %v1213, %v1209
        %v1470 = vpack.c.b16 %v1218, %v1214
        %v1471 = vpack.c.b16 %v1219, %v1215
        %v1472 = vpack.c.b16 %v1220, %v1216
        %v1473 = vpack.c.b16 %v1221, %v1217
        %v1474 = vpack.c.b16 %v1226, %v1222
        %v1475 = vpack.c.b16 %v1227, %v1223
        %v1476 = vpack.c.b16 %v1228, %v1224
        %v1477 = vpack.c.b16 %v1229, %v1225
        %v1478 = vpack.c.b16 %v1234, %v1230
        %v1479 = vpack.c.b16 %v1235, %v1231
        %v1480 = vpack.c.b16 %v1236, %v1232
        %v1481 = vpack.c.b16 %v1237, %v1233
        %v1482 = vpack.c.b16 %v1242, %v1238
        %v1483 = vpack.c.b16 %v1243, %v1239
        %v1484 = vpack.c.b16 %v1244, %v1240
        %v1485 = vpack.c.b16 %v1245, %v1241
        %v1486 = vpack.c.b16 %v1250, %v1246
        %v1487 = vpack.c.b16 %v1251, %v1247
        %v1488 = vpack.c.b16 %v1252, %v1248
        %v1489 = vpack.c.b16 %v1253, %v1249
        %v1490 = vpack.c.b16 %v1258, %v1254
        %v1491 = vpack.c.b16 %v1259, %v1255
        %v1492 = vpack.c.b16 %v1260, %v1256
        %v1493 = vpack.c.b16 %v1261, %v1257
        %v1494 = vpack.c.b16 %v1266, %v1262
        %v1495 = vpack.c.b16 %v1267, %v1263
        %v1496 = vpack.c.b16 %v1268, %v1264
        %v1497 = vpack.c.b16 %v1269, %v1265
        %v1498 = vpack.c.b16 %v1274, %v1270
        %v1499 = vpack.c.b16 %v1275, %v1271
        %v1500 = vpack.c.b16 %v1276, %v1272
        %v1501 = vpack.c.b16 %v1277, %v1273
        %1726 = vmatprep.subr.bf16.mxu0 %v1279
        %1727 = vmatpush1.bf16.msra.mxu0 %v1278
        %1728 = vmatprep.subr.bf16.mxu0 %v1283
        %1729 = vmatpush1.bf16.msra.mxu0 %v1282
        %1730 = vmatprep.subr.bf16.mxu0 %v1287
        %1731 = vmatpush1.bf16.msra.mxu0 %v1286
        %1732 = vmatprep.subr.bf16.mxu0 %v1291
        %1733 = vmatpush1.bf16.msra.mxu0 %v1290
        %1734 = vmatprep.subr.bf16.mxu0 %v1295
        %1735 = vmatpush1.bf16.msra.mxu0 %v1294
        %1736 = vmatprep.subr.bf16.mxu0 %v1299
        %1737 = vmatpush1.bf16.msra.mxu0 %v1298
        %1738 = vmatprep.subr.bf16.mxu0 %v1303
        %1739 = vmatpush1.bf16.msra.mxu0 %v1302
        %1740 = vmatprep.subr.bf16.mxu0 %v1307
        %1741 = vmatpush1.bf16.msra.mxu0 %v1306
        %1742 = vmatprep.subr.bf16.mxu0 %v1311
        %1743 = vmatpush1.bf16.msra.mxu0 %v1310
        %1744 = vmatprep.subr.bf16.mxu0 %v1315
        %1745 = vmatpush1.bf16.msra.mxu0 %v1314
        %1746 = vmatprep.subr.bf16.mxu0 %v1319
        %1747 = vmatpush1.bf16.msra.mxu0 %v1318
        %1748 = vmatprep.subr.bf16.mxu0 %v1323
        %1749 = vmatpush1.bf16.msra.mxu0 %v1322
        %1750 = vmatprep.subr.bf16.mxu0 %v1327
        %1751 = vmatpush1.bf16.msra.mxu0 %v1326
        %1752 = vmatprep.subr.bf16.mxu0 %v1331
        %1753 = vmatpush1.bf16.msra.mxu0 %v1330
        %1754 = vmatprep.subr.bf16.mxu0 %v1335
        %1755 = vmatpush1.bf16.msra.mxu0 %v1334
        %1756 = vmatprep.subr.bf16.mxu0 %v1339
        %1757 = vmatpush1.bf16.msra.mxu0 %v1338
        %1758 = vmatprep.mubr.bf16.mxu0 %v593
        %1759 = vmatmul.mubr.bf16.gmra.mrb[0].mxu0 %v592
        %v1760 = vpop.f32.mrb[0].mxu0
        %v1761 = vadd.f32 %v553, %v1760
        %v1762 = vpop.f32.mrb[0].mxu0
        %v1763 = vadd.f32 %v557, %v1762
        %v1764 = vpop.f32.mrb[0].mxu0
        %v1765 = vadd.f32 %v553, %v1764
        %v1766 = vpop.f32.mrb[0].mxu0
        %v1767 = vadd.f32 %v557, %v1766
        %1768 = vdwg.mxu0
        %1769 = vmatprep.subr.bf16.mxu0 %v1343
        %1770 = vmatpush1.bf16.msra.mxu0 %v1342
        %1771 = vmatprep.subr.bf16.mxu0 %v1347
        %1772 = vmatpush1.bf16.msra.mxu0 %v1346
        %1773 = vmatprep.subr.bf16.mxu0 %v1351
        %1774 = vmatpush1.bf16.msra.mxu0 %v1350
        %1775 = vmatprep.subr.bf16.mxu0 %v1355
        %1776 = vmatpush1.bf16.msra.mxu0 %v1354
        %1777 = vmatprep.subr.bf16.mxu0 %v1359
        %1778 = vmatpush1.bf16.msra.mxu0 %v1358
        %1779 = vmatprep.subr.bf16.mxu0 %v1363
        %1780 = vmatpush1.bf16.msra.mxu0 %v1362
        %1781 = vmatprep.subr.bf16.mxu0 %v1367
        %1782 = vmatpush1.bf16.msra.mxu0 %v1366
        %1783 = vmatprep.subr.bf16.mxu0 %v1371
        %1784 = vmatpush1.bf16.msra.mxu0 %v1370
        %1785 = vmatprep.subr.bf16.mxu0 %v1375
        %1786 = vmatpush1.bf16.msra.mxu0 %v1374
        %1787 = vmatprep.subr.bf16.mxu0 %v1379
        %1788 = vmatpush1.bf16.msra.mxu0 %v1378
        %1789 = vmatprep.subr.bf16.mxu0 %v1383
        %1790 = vmatpush1.bf16.msra.mxu0 %v1382
        %1791 = vmatprep.subr.bf16.mxu0 %v1387
        %1792 = vmatpush1.bf16.msra.mxu0 %v1386
        %1793 = vmatprep.subr.bf16.mxu0 %v1391
        %1794 = vmatpush1.bf16.msra.mxu0 %v1390
        %1795 = vmatprep.subr.bf16.mxu0 %v1395
        %1796 = vmatpush1.bf16.msra.mxu0 %v1394
        %1797 = vmatprep.subr.bf16.mxu0 %v1399
        %1798 = vmatpush1.bf16.msra.mxu0 %v1398
        %1799 = vmatprep.subr.bf16.mxu0 %v1403
        %1800 = vmatpush1.bf16.msra.mxu0 %v1402
        %1801 = vmatprep.mubr.bf16.mxu0 %v595
        %1802 = vmatmul.mubr.bf16.gmra.mrb[0].mxu0 %v594
        %v1803 = vpop.f32.mrb[0].mxu0
        %v1804 = vadd.f32 %v1761, %v1803
        %v1805 = vpop.f32.mrb[0].mxu0
        %v1806 = vadd.f32 %v1763, %v1805
        %v1807 = vpop.f32.mrb[0].mxu0
        %v1808 = vadd.f32 %v1765, %v1807
        %v1809 = vpop.f32.mrb[0].mxu0
        %v1810 = vadd.f32 %v1767, %v1809
        %1811 = vdwg.mxu0
        %1812 = vmatprep.subr.bf16.mxu0 %v1407
        %1813 = vmatpush1.bf16.msra.mxu0 %v1406
        %1814 = vmatprep.subr.bf16.mxu0 %v1411
        %1815 = vmatpush1.bf16.msra.mxu0 %v1410
        %1816 = vmatprep.subr.bf16.mxu0 %v1415
        %1817 = vmatpush1.bf16.msra.mxu0 %v1414
        %1818 = vmatprep.subr.bf16.mxu0 %v1419
        %1819 = vmatpush1.bf16.msra.mxu0 %v1418
        %1820 = vmatprep.subr.bf16.mxu0 %v1423
        %1821 = vmatpush1.bf16.msra.mxu0 %v1422
        %1822 = vmatprep.subr.bf16.mxu0 %v1427
        %1823 = vmatpush1.bf16.msra.mxu0 %v1426
        %1824 = vmatprep.subr.bf16.mxu0 %v1431
        %1825 = vmatpush1.bf16.msra.mxu0 %v1430
        %1826 = vmatprep.subr.bf16.mxu0 %v1435
        %1827 = vmatpush1.bf16.msra.mxu0 %v1434
        %1828 = vmatprep.subr.bf16.mxu0 %v1439
        %1829 = vmatpush1.bf16.msra.mxu0 %v1438
        %1830 = vmatprep.subr.bf16.mxu0 %v1443
        %1831 = vmatpush1.bf16.msra.mxu0 %v1442
        %1832 = vmatprep.subr.bf16.mxu0 %v1447
        %1833 = vmatpush1.bf16.msra.mxu0 %v1446
        %1834 = vmatprep.subr.bf16.mxu0 %v1451
        %1835 = vmatpush1.bf16.msra.mxu0 %v1450
        %1836 = vmatprep.subr.bf16.mxu0 %v1455
        %1837 = vmatpush1.bf16.msra.mxu0 %v1454
        %1838 = vmatprep.subr.bf16.mxu0 %v1459
        %1839 = vmatpush1.bf16.msra.mxu0 %v1458
        %1840 = vmatprep.subr.bf16.mxu0 %v1463
        %1841 = vmatpush1.bf16.msra.mxu0 %v1462
        %1842 = vmatprep.subr.bf16.mxu0 %v1467
        %1843 = vmatpush1.bf16.msra.mxu0 %v1466
        %1844 = vmatprep.mubr.bf16.mxu0 %v597
        %1845 = vmatmul.mubr.bf16.gmra.mrb[0].mxu0 %v596
        %v1846 = vpop.f32.mrb[0].mxu0
        %v1847 = vadd.f32 %v1804, %v1846
        %v1848 = vpop.f32.mrb[0].mxu0
        %v1849 = vadd.f32 %v1806, %v1848
        %v1850 = vpop.f32.mrb[0].mxu0
        %v1851 = vadd.f32 %v1808, %v1850
        %v1852 = vpop.f32.mrb[0].mxu0
        %v1853 = vadd.f32 %v1810, %v1852
        %1854 = vdwg.mxu0
        %1855 = vmatprep.subr.bf16.mxu0 %v1471
        %1856 = vmatpush1.bf16.msra.mxu0 %v1470
        %1857 = vmatprep.subr.bf16.mxu0 %v1475
        %1858 = vmatpush1.bf16.msra.mxu0 %v1474
        %1859 = vmatprep.subr.bf16.mxu0 %v1479
        %1860 = vmatpush1.bf16.msra.mxu0 %v1478
        %1861 = vmatprep.subr.bf16.mxu0 %v1483
        %1862 = vmatpush1.bf16.msra.mxu0 %v1482
        %1863 = vmatprep.subr.bf16.mxu0 %v1487
        %1864 = vmatpush1.bf16.msra.mxu0 %v1486
        %1865 = vmatprep.subr.bf16.mxu0 %v1491
        %1866 = vmatpush1.bf16.msra.mxu0 %v1490
        %1867 = vmatprep.subr.bf16.mxu0 %v1495
        %1868 = vmatpush1.bf16.msra.mxu0 %v1494
        %1869 = vmatprep.subr.bf16.mxu0 %v1499
        %1870 = vmatpush1.bf16.msra.mxu0 %v1498
        %1871 = vmatprep.subr.bf16.mxu0 0
        %1872 = vmatpush1.bf16.msra.mxu0 0
        %1873 = vmatprep.subr.bf16.mxu0 0
        %1874 = vmatpush1.bf16.msra.mxu0 0
        %1875 = vmatprep.subr.bf16.mxu0 0
        %1876 = vmatpush1.bf16.msra.mxu0 0
        %1877 = vmatprep.subr.bf16.mxu0 0
        %1878 = vmatpush1.bf16.msra.mxu0 0
        %1879 = vmatprep.subr.bf16.mxu0 0
        %1880 = vmatpush1.bf16.msra.mxu0 0
        %1881 = vmatprep.subr.bf16.mxu0 0
        %1882 = vmatpush1.bf16.msra.mxu0 0
        %1883 = vmatprep.subr.bf16.mxu0 0
        %1884 = vmatpush1.bf16.msra.mxu0 0
        %1885 = vmatprep.subr.bf16.mxu0 0
        %1886 = vmatpush1.bf16.msra.mxu0 0
        %1887 = vmatprep.mubr.bf16.mxu0 0
        %1888 = vmatmul.mubr.bf16.gmra.mrb[0].mxu0 %v598
        %v1889 = vpop.f32.mrb[0].mxu0
        %v1890 = vadd.f32 %v1847, %v1889
        %v1891 = vpop.f32.mrb[0].mxu0
        %v1892 = vadd.f32 %v1849, %v1891
        %v1893 = vpop.f32.mrb[0].mxu0
        %v1894 = vadd.f32 %v1851, %v1893
        %v1895 = vpop.f32.mrb[0].mxu0
        %v1896 = vadd.f32 %v1853, %v1895
        %1897 = vdwg.mxu0
        %1898 = vmatprep.subr.bf16.mxu0 %v1281
        %1899 = vmatpush1.bf16.msra.mxu0 %v1280
        %1900 = vmatprep.subr.bf16.mxu0 %v1285
        %1901 = vmatpush1.bf16.msra.mxu0 %v1284
        %1902 = vmatprep.subr.bf16.mxu0 %v1289
        %1903 = vmatpush1.bf16.msra.mxu0 %v1288
        %1904 = vmatprep.subr.bf16.mxu0 %v1293
        %1905 = vmatpush1.bf16.msra.mxu0 %v1292
        %1906 = vmatprep.subr.bf16.mxu0 %v1297
        %1907 = vmatpush1.bf16.msra.mxu0 %v1296
        %1908 = vmatprep.subr.bf16.mxu0 %v1301
        %1909 = vmatpush1.bf16.msra.mxu0 %v1300
        %1910 = vmatprep.subr.bf16.mxu0 %v1305
        %1911 = vmatpush1.bf16.msra.mxu0 %v1304
        %1912 = vmatprep.subr.bf16.mxu0 %v1309
        %1913 = vmatpush1.bf16.msra.mxu0 %v1308
        %1914 = vmatprep.subr.bf16.mxu0 %v1313
        %1915 = vmatpush1.bf16.msra.mxu0 %v1312
        %1916 = vmatprep.subr.bf16.mxu0 %v1317
        %1917 = vmatpush1.bf16.msra.mxu0 %v1316
        %1918 = vmatprep.subr.bf16.mxu0 %v1321
        %1919 = vmatpush1.bf16.msra.mxu0 %v1320
        %1920 = vmatprep.subr.bf16.mxu0 %v1325
        %1921 = vmatpush1.bf16.msra.mxu0 %v1324
        %1922 = vmatprep.subr.bf16.mxu0 %v1329
        %1923 = vmatpush1.bf16.msra.mxu0 %v1328
        %1924 = vmatprep.subr.bf16.mxu0 %v1333
        %1925 = vmatpush1.bf16.msra.mxu0 %v1332
        %1926 = vmatprep.subr.bf16.mxu0 %v1337
        %1927 = vmatpush1.bf16.msra.mxu0 %v1336
        %1928 = vmatprep.subr.bf16.mxu0 %v1341
        %1929 = vmatpush1.bf16.msra.mxu0 %v1340
        %1930 = vmatprep.mubr.bf16.mxu0 %v593
        %1931 = vmatmul.mubr.bf16.gmra.mrb[0].mxu0 %v592
        %v1932 = vpop.f32.mrb[0].mxu0
        %v1933 = vadd.f32 %v561, %v1932
        %v1934 = vpop.f32.mrb[0].mxu0
        %v1935 = vadd.f32 %v565, %v1934
        %v1936 = vpop.f32.mrb[0].mxu0
        %v1937 = vadd.f32 %v561, %v1936
        %v1938 = vpop.f32.mrb[0].mxu0
        %v1939 = vadd.f32 %v565, %v1938
        %1940 = vdwg.mxu0
        %1941 = vmatprep.subr.bf16.mxu0 %v1345
        %1942 = vmatpush1.bf16.msra.mxu0 %v1344
        %1943 = vmatprep.subr.bf16.mxu0 %v1349
        %1944 = vmatpush1.bf16.msra.mxu0 %v1348
        %1945 = vmatprep.subr.bf16.mxu0 %v1353
        %1946 = vmatpush1.bf16.msra.mxu0 %v1352
        %1947 = vmatprep.subr.bf16.mxu0 %v1357
        %1948 = vmatpush1.bf16.msra.mxu0 %v1356
        %1949 = vmatprep.subr.bf16.mxu0 %v1361
        %1950 = vmatpush1.bf16.msra.mxu0 %v1360
        %1951 = vmatprep.subr.bf16.mxu0 %v1365
        %1952 = vmatpush1.bf16.msra.mxu0 %v1364
        %1953 = vmatprep.subr.bf16.mxu0 %v1369
        %1954 = vmatpush1.bf16.msra.mxu0 %v1368
        %1955 = vmatprep.subr.bf16.mxu0 %v1373
        %1956 = vmatpush1.bf16.msra.mxu0 %v1372
        %1957 = vmatprep.subr.bf16.mxu0 %v1377
        %1958 = vmatpush1.bf16.msra.mxu0 %v1376
        %1959 = vmatprep.subr.bf16.mxu0 %v1381
        %1960 = vmatpush1.bf16.msra.mxu0 %v1380
        %1961 = vmatprep.subr.bf16.mxu0 %v1385
        %1962 = vmatpush1.bf16.msra.mxu0 %v1384
        %1963 = vmatprep.subr.bf16.mxu0 %v1389
        %1964 = vmatpush1.bf16.msra.mxu0 %v1388
        %1965 = vmatprep.subr.bf16.mxu0 %v1393
        %1966 = vmatpush1.bf16.msra.mxu0 %v1392
        %1967 = vmatprep.subr.bf16.mxu0 %v1397
        %1968 = vmatpush1.bf16.msra.mxu0 %v1396
        %1969 = vmatprep.subr.bf16.mxu0 %v1401
        %1970 = vmatpush1.bf16.msra.mxu0 %v1400
        %1971 = vmatprep.subr.bf16.mxu0 %v1405
        %1972 = vmatpush1.bf16.msra.mxu0 %v1404
        %1973 = vmatprep.mubr.bf16.mxu0 %v595
        %1974 = vmatmul.mubr.bf16.gmra.mrb[0].mxu0 %v594
        %v1975 = vpop.f32.mrb[0].mxu0
        %v1976 = vadd.f32 %v1933, %v1975
        %v1977 = vpop.f32.mrb[0].mxu0
        %v1978 = vadd.f32 %v1935, %v1977
        %v1979 = vpop.f32.mrb[0].mxu0
        %v1980 = vadd.f32 %v1937, %v1979
        %v1981 = vpop.f32.mrb[0].mxu0
        %v1982 = vadd.f32 %v1939, %v1981
        %1983 = vdwg.mxu0
        %1984 = vmatprep.subr.bf16.mxu0 %v1409
        %1985 = vmatpush1.bf16.msra.mxu0 %v1408
        %1986 = vmatprep.subr.bf16.mxu0 %v1413
        %1987 = vmatpush1.bf16.msra.mxu0 %v1412
        %1988 = vmatprep.subr.bf16.mxu0 %v1417
        %1989 = vmatpush1.bf16.msra.mxu0 %v1416
        %1990 = vmatprep.subr.bf16.mxu0 %v1421
        %1991 = vmatpush1.bf16.msra.mxu0 %v1420
        %1992 = vmatprep.subr.bf16.mxu0 %v1425
        %1993 = vmatpush1.bf16.msra.mxu0 %v1424
        %1994 = vmatprep.subr.bf16.mxu0 %v1429
        %1995 = vmatpush1.bf16.msra.mxu0 %v1428
        %1996 = vmatprep.subr.bf16.mxu0 %v1433
        %1997 = vmatpush1.bf16.msra.mxu0 %v1432
        %1998 = vmatprep.subr.bf16.mxu0 %v1437
        %1999 = vmatpush1.bf16.msra.mxu0 %v1436
        %2000 = vmatprep.subr.bf16.mxu0 %v1441
        %2001 = vmatpush1.bf16.msra.mxu0 %v1440
        %2002 = vmatprep.subr.bf16.mxu0 %v1445
        %2003 = vmatpush1.bf16.msra.mxu0 %v1444
        %2004 = vmatprep.subr.bf16.mxu0 %v1449
        %2005 = vmatpush1.bf16.msra.mxu0 %v1448
        %2006 = vmatprep.subr.bf16.mxu0 %v1453
        %2007 = vmatpush1.bf16.msra.mxu0 %v1452
        %2008 = vmatprep.subr.bf16.mxu0 %v1457
        %2009 = vmatpush1.bf16.msra.mxu0 %v1456
        %2010 = vmatprep.subr.bf16.mxu0 %v1461
        %2011 = vmatpush1.bf16.msra.mxu0 %v1460
        %2012 = vmatprep.subr.bf16.mxu0 %v1465
        %2013 = vmatpush1.bf16.msra.mxu0 %v1464
        %2014 = vmatprep.subr.bf16.mxu0 %v1469
        %2015 = vmatpush1.bf16.msra.mxu0 %v1468
        %2016 = vmatprep.mubr.bf16.mxu0 %v597
        %2017 = vmatmul.mubr.bf16.gmra.mrb[0].mxu0 %v596
        %v2018 = vpop.f32.mrb[0].mxu0
        %v2019 = vadd.f32 %v1976, %v2018
        %v2020 = vpop.f32.mrb[0].mxu0
        %v2021 = vadd.f32 %v1978, %v2020
        %v2022 = vpop.f32.mrb[0].mxu0
        %v2023 = vadd.f32 %v1980, %v2022
        %v2024 = vpop.f32.mrb[0].mxu0
        %v2025 = vadd.f32 %v1982, %v2024
        %2026 = vdwg.mxu0
        %2027 = vmatprep.subr.bf16.mxu0 %v1473
        %2028 = vmatpush1.bf16.msra.mxu0 %v1472
        %2029 = vmatprep.subr.bf16.mxu0 %v1477
        %2030 = vmatpush1.bf16.msra.mxu0 %v1476
        %2031 = vmatprep.subr.bf16.mxu0 %v1481
        %2032 = vmatpush1.bf16.msra.mxu0 %v1480
        %2033 = vmatprep.subr.bf16.mxu0 %v1485
        %2034 = vmatpush1.bf16.msra.mxu0 %v1484
        %2035 = vmatprep.subr.bf16.mxu0 %v1489
        %2036 = vmatpush1.bf16.msra.mxu0 %v1488
        %2037 = vmatprep.subr.bf16.mxu0 %v1493
        %2038 = vmatpush1.bf16.msra.mxu0 %v1492
        %2039 = vmatprep.subr.bf16.mxu0 %v1497
        %2040 = vmatpush1.bf16.msra.mxu0 %v1496
        %2041 = vmatprep.subr.bf16.mxu0 %v1501
        %2042 = vmatpush1.bf16.msra.mxu0 %v1500
        %2043 = vmatprep.subr.bf16.mxu0 0
        %2044 = vmatpush1.bf16.msra.mxu0 0
        %2045 = vmatprep.subr.bf16.mxu0 0
        %2046 = vmatpush1.bf16.msra.mxu0 0
        %2047 = vmatprep.subr.bf16.mxu0 0
        %2048 = vmatpush1.bf16.msra.mxu0 0
        %2049 = vmatprep.subr.bf16.mxu0 0
        %2050 = vmatpush1.bf16.msra.mxu0 0
        %2051 = vmatprep.subr.bf16.mxu0 0
        %2052 = vmatpush1.bf16.msra.mxu0 0
        %2053 = vmatprep.subr.bf16.mxu0 0
        %2054 = vmatpush1.bf16.msra.mxu0 0
        %2055 = vmatprep.subr.bf16.mxu0 0
        %2056 = vmatpush1.bf16.msra.mxu0 0
        %2057 = vmatprep.subr.bf16.mxu0 0
        %2058 = vmatpush1.bf16.msra.mxu0 0
        %2059 = vmatprep.mubr.bf16.mxu0 0
        %2060 = vmatmul.mubr.bf16.gmra.mrb[0].mxu0 %v598
        %v2061 = vpop.f32.mrb[0].mxu0
        %v2062 = vadd.f32 %v2019, %v2061
        %v2063 = vpop.f32.mrb[0].mxu0
        %v2064 = vadd.f32 %v2021, %v2063
        %v2065 = vpop.f32.mrb[0].mxu0
        %v2066 = vadd.f32 %v2023, %v2065
        %v2067 = vpop.f32.mrb[0].mxu0
        %v2068 = vadd.f32 %v2025, %v2067
        %2069 = vdwg.mxu0
        %v2070 = vmax.f32 %v1890, 0.0
        %v2071 = vmax.f32 %v1892, 0.0
        %v2072 = vmax.f32 %v2062, 0.0
        %v2073 = vmax.f32 %v2064, 0.0
        %v2074 = vmax.f32 %v1894, 0.0
        %v2075 = vmax.f32 %v1896, 0.0
        %v2076 = vmax.f32 %v2066, 0.0
        %v2077 = vmax.f32 %v2068, 0.0
        %v2078 = vpack.c.bf16 %v2074, %v2070
        %v2079 = vpack.c.bf16 %v2075, %v2071
        %v2080 = vpack.c.bf16 %v2076, %v2072
        %v2081 = vpack.c.bf16 %v2077, %v2073
        %v2082 = vld [vmem:[#allocation4] sm:$0xff]
        %v2083 = vld [vmem:[#allocation4 + $0x8] sm:$0xff]
        %v2084 = vld [vmem:[#allocation4 + $0x10] sm:$0xff]
        %v2085 = vld [vmem:[#allocation4 + $0x18] sm:$0xff]
        %v2086 = vld [vmem:[#allocation4 + $0x20] sm:$0xff]
        %v2087 = vld [vmem:[#allocation4 + $0x28] sm:$0xff]
        %v2088 = vld [vmem:[#allocation4 + $0x30] sm:$0xff]
        %v2089 = vld [vmem:[#allocation4 + $0x38] sm:$0xff]
        %v2090 = vld [vmem:[#allocation4 + $0x40] sm:$0xff]
        %v2091 = vld [vmem:[#allocation4 + $0x48] sm:$0xff]
        %v2092 = vld [vmem:[#allocation4 + $0x50] sm:$0xff]
        %v2093 = vld [vmem:[#allocation4 + $0x58] sm:$0xff]
        %v2094 = vld [vmem:[#allocation4 + $0x60] sm:$0xff]
        %v2095 = vld [vmem:[#allocation4 + $0x68] sm:$0xff]
        %v2096 = vld [vmem:[#allocation4 + $0x70] sm:$0xff]
        %v2097 = vld [vmem:[#allocation4 + $0x78] sm:$0xff]
        %v2098 = vld [vmem:[#allocation4 + $0x80] sm:$0xff]
        %v2099 = vld [vmem:[#allocation4 + $0x88] sm:$0xff]
        %v2100 = vld [vmem:[#allocation4 + $0x90] sm:$0xff]
        %v2101 = vld [vmem:[#allocation4 + $0x98] sm:$0xff]
        %v2102 = vld [vmem:[#allocation4 + $0xa0] sm:$0xff]
        %v2103 = vld [vmem:[#allocation4 + $0xa8] sm:$0xff]
        %v2104 = vld [vmem:[#allocation4 + $0xb0] sm:$0xff]
        %v2105 = vld [vmem:[#allocation4 + $0xb8] sm:$0xff]
        %v2106 = vld [vmem:[#allocation4 + $0xc0] sm:$0xff]
        %v2107 = vld [vmem:[#allocation4 + $0xc8] sm:$0xff]
        %v2108 = vld [vmem:[#allocation4 + $0xd0] sm:$0xff]
        %v2109 = vld [vmem:[#allocation4 + $0xd8] sm:$0xff]
        %v2110 = vld [vmem:[#allocation4 + $0xe0] sm:$0xff]
        %v2111 = vld [vmem:[#allocation4 + $0xe8] sm:$0xff]
        %v2112 = vld [vmem:[#allocation4 + $0xf0] sm:$0xff]
        %v2113 = vld [vmem:[#allocation4 + $0xf8] sm:$0xff]
        %v2114 = vld [vmem:[#allocation4 + $0x100] sm:$0xff]
        %v2115 = vld [vmem:[#allocation4 + $0x108] sm:$0xff]
        %v2116 = vld [vmem:[#allocation4 + $0x110] sm:$0xff]
        %v2117 = vld [vmem:[#allocation4 + $0x118] sm:$0xff]
        %v2118 = vld [vmem:[#allocation4 + $0x120] sm:$0xff]
        %v2119 = vld [vmem:[#allocation4 + $0x128] sm:$0xff]
        %v2120 = vld [vmem:[#allocation4 + $0x130] sm:$0xff]
        %v2121 = vld [vmem:[#allocation4 + $0x138] sm:$0xff]
        %v2122 = vld [vmem:[#allocation4 + $0x140] sm:$0xff]
        %v2123 = vld [vmem:[#allocation4 + $0x148] sm:$0xff]
        %v2124 = vld [vmem:[#allocation4 + $0x150] sm:$0xff]
        %v2125 = vld [vmem:[#allocation4 + $0x158] sm:$0xff]
        %v2126 = vld [vmem:[#allocation4 + $0x160] sm:$0xff]
        %v2127 = vld [vmem:[#allocation4 + $0x168] sm:$0xff]
        %v2128 = vld [vmem:[#allocation4 + $0x170] sm:$0xff]
        %v2129 = vld [vmem:[#allocation4 + $0x178] sm:$0xff]
        %v2130 = vld [vmem:[#allocation4 + $0x180] sm:$0xff]
        %v2131 = vld [vmem:[#allocation4 + $0x188] sm:$0xff]
        %v2132 = vld [vmem:[#allocation4 + $0x190] sm:$0xff]
        %v2133 = vld [vmem:[#allocation4 + $0x198] sm:$0xff]
        %v2134 = vld [vmem:[#allocation4 + $0x1a0] sm:$0xff]
        %v2135 = vld [vmem:[#allocation4 + $0x1a8] sm:$0xff]
        %v2136 = vld [vmem:[#allocation4 + $0x1b0] sm:$0xff]
        %v2137 = vld [vmem:[#allocation4 + $0x1b8] sm:$0xff]
        %v2138 = vld [vmem:[#allocation4 + $0x1c0] sm:$0xff]
        %v2139 = vld [vmem:[#allocation4 + $0x1c8] sm:$0xff]
        %v2140 = vld [vmem:[#allocation4 + $0x1d0] sm:$0xff]
        %v2141 = vld [vmem:[#allocation4 + $0x1d8] sm:$0xff]
        %v2142 = vld [vmem:[#allocation4 + $0x1e0] sm:$0xff]
        %v2143 = vld [vmem:[#allocation4 + $0x1e8] sm:$0xff]
        %v2144 = vld [vmem:[#allocation4 + $0x1f0] sm:$0xff]
        %v2145 = vld [vmem:[#allocation4 + $0x1f8] sm:$0xff]
        %v2146 = vld [vmem:[#allocation4 + $0x200] sm:$0xff]
        %v2147 = vld [vmem:[#allocation4 + $0x208] sm:$0xff]
        %v2148 = vld [vmem:[#allocation4 + $0x210] sm:$0xff]
        %v2149 = vld [vmem:[#allocation4 + $0x218] sm:$0xff]
        %v2150 = vld [vmem:[#allocation4 + $0x220] sm:$0xff]
        %v2151 = vld [vmem:[#allocation4 + $0x228] sm:$0xff]
        %v2152 = vld [vmem:[#allocation4 + $0x230] sm:$0xff]
        %v2153 = vld [vmem:[#allocation4 + $0x238] sm:$0xff]
        %v2154 = vld [vmem:[#allocation4 + $0x240] sm:$0xff]
        %v2155 = vld [vmem:[#allocation4 + $0x248] sm:$0xff]
        %v2156 = vld [vmem:[#allocation4 + $0x250] sm:$0xff]
        %v2157 = vld [vmem:[#allocation4 + $0x258] sm:$0xff]
        %v2158 = vld [vmem:[#allocation4 + $0x260] sm:$0xff]
        %v2159 = vld [vmem:[#allocation4 + $0x268] sm:$0xff]
        %v2160 = vld [vmem:[#allocation4 + $0x270] sm:$0xff]
        %v2161 = vld [vmem:[#allocation4 + $0x278] sm:$0xff]
        %v2162 = vld [vmem:[#allocation4 + $0x280] sm:$0xff]
        %v2163 = vld [vmem:[#allocation4 + $0x288] sm:$0xff]
        %v2164 = vld [vmem:[#allocation4 + $0x290] sm:$0xff]
        %v2165 = vld [vmem:[#allocation4 + $0x298] sm:$0xff]
        %v2166 = vld [vmem:[#allocation4 + $0x2a0] sm:$0xff]
        %v2167 = vld [vmem:[#allocation4 + $0x2a8] sm:$0xff]
        %v2168 = vld [vmem:[#allocation4 + $0x2b0] sm:$0xff]
        %v2169 = vld [vmem:[#allocation4 + $0x2b8] sm:$0xff]
        %v2170 = vld [vmem:[#allocation4 + $0x2c0] sm:$0xff]
        %v2171 = vld [vmem:[#allocation4 + $0x2c8] sm:$0xff]
        %v2172 = vld [vmem:[#allocation4 + $0x2d0] sm:$0xff]
        %v2173 = vld [vmem:[#allocation4 + $0x2d8] sm:$0xff]
        %v2174 = vld [vmem:[#allocation4 + $0x2e0] sm:$0xff]
        %v2175 = vld [vmem:[#allocation4 + $0x2e8] sm:$0xff]
        %v2176 = vld [vmem:[#allocation4 + $0x2f0] sm:$0xff]
        %v2177 = vld [vmem:[#allocation4 + $0x2f8] sm:$0xff]
        %v2178 = vld [vmem:[#allocation4 + $0x300] sm:$0xff]
        %v2179 = vld [vmem:[#allocation4 + $0x308] sm:$0xff]
        %v2180 = vld [vmem:[#allocation4 + $0x310] sm:$0xff]
        %v2181 = vld [vmem:[#allocation4 + $0x318] sm:$0xff]
        %v2182 = vld [vmem:[#allocation4 + $0x320] sm:$0xff]
        %v2183 = vld [vmem:[#allocation4 + $0x328] sm:$0xff]
        %v2184 = vld [vmem:[#allocation4 + $0x330] sm:$0xff]
        %v2185 = vld [vmem:[#allocation4 + $0x338] sm:$0xff]
        %v2186 = vld [vmem:[#allocation4 + $0x340] sm:$0xff]
        %v2187 = vld [vmem:[#allocation4 + $0x348] sm:$0xff]
        %v2188 = vld [vmem:[#allocation4 + $0x350] sm:$0xff]
        %v2189 = vld [vmem:[#allocation4 + $0x358] sm:$0xff]
        %v2190 = vld [vmem:[#allocation4 + $0x360] sm:$0xff]
        %v2191 = vld [vmem:[#allocation4 + $0x368] sm:$0xff]
        %v2192 = vld [vmem:[#allocation4 + $0x370] sm:$0xff]
        %v2193 = vld [vmem:[#allocation4 + $0x378] sm:$0xff]
        %v2194 = vld [vmem:[#allocation4 + $0x380] sm:$0xff]
        %v2195 = vld [vmem:[#allocation4 + $0x388] sm:$0xff]
        %v2196 = vld [vmem:[#allocation4 + $0x390] sm:$0xff]
        %v2197 = vld [vmem:[#allocation4 + $0x398] sm:$0xff]
        %v2198 = vld [vmem:[#allocation4 + $0x3a0] sm:$0xff]
        %v2199 = vld [vmem:[#allocation4 + $0x3a8] sm:$0xff]
        %v2200 = vld [vmem:[#allocation4 + $0x3b0] sm:$0xff]
        %v2201 = vld [vmem:[#allocation4 + $0x3b8] sm:$0xff]
        %v2202 = vld [vmem:[#allocation4 + $0x3c0] sm:$0xff]
        %v2203 = vld [vmem:[#allocation4 + $0x3c8] sm:$0xff]
        %v2204 = vld [vmem:[#allocation4 + $0x3d0] sm:$0xff]
        %v2205 = vld [vmem:[#allocation4 + $0x3d8] sm:$0xff]
        %v2206 = vld [vmem:[#allocation4 + $0x3e0] sm:$0xff]
        %v2207 = vld [vmem:[#allocation4 + $0x3e8] sm:$0xff]
        %v2208 = vld [vmem:[#allocation4 + $0x3f0] sm:$0xff]
        %v2209 = vld [vmem:[#allocation4 + $0x3f8] sm:$0xff]
        %v2210 = vld [vmem:[%s4] sm:$0xf]
        %v2212 = vlaneseq
        %v2213 = vshrl.u32 %v2212, 7
        %v2214 = vsub.s32 0, %v2213
        %v2215 = vrot.slane %v2210, %v2214
        %v2216 = vlaneseq
        %v2217 = vshrl.u32 %v2216, 7
        %v2218 = vsub.s32 1, %v2217
        %v2219 = vrot.slane %v2210, %v2218
        %v2220 = vlaneseq
        %v2221 = vshrl.u32 %v2220, 7
        %v2222 = vsub.s32 2, %v2221
        %v2223 = vrot.slane %v2210, %v2222
        %v2224 = vlaneseq
        %v2225 = vshrl.u32 %v2224, 7
        %v2226 = vsub.s32 3, %v2225
        %v2227 = vrot.slane %v2210, %v2226
        %v2360 = vunpack.c.l.b16 %v2082
        %v2361 = vunpack.c.h.b16 %v2082
        %v2362 = vunpack.c.l.b16 %v2083
        %v2363 = vunpack.c.h.b16 %v2083
        %v2364 = vunpack.c.l.b16 %v2084
        %v2365 = vunpack.c.h.b16 %v2084
        %v2366 = vunpack.c.l.b16 %v2085
        %v2367 = vunpack.c.h.b16 %v2085
        %v2368 = vunpack.c.l.b16 %v2086
        %v2369 = vunpack.c.h.b16 %v2086
        %v2370 = vunpack.c.l.b16 %v2087
        %v2371 = vunpack.c.h.b16 %v2087
        %v2372 = vunpack.c.l.b16 %v2088
        %v2373 = vunpack.c.h.b16 %v2088
        %v2374 = vunpack.c.l.b16 %v2089
        %v2375 = vunpack.c.h.b16 %v2089
        %v2376 = vunpack.c.l.b16 %v2090
        %v2377 = vunpack.c.h.b16 %v2090
        %v2378 = vunpack.c.l.b16 %v2091
        %v2379 = vunpack.c.h.b16 %v2091
        %v2380 = vunpack.c.l.b16 %v2092
        %v2381 = vunpack.c.h.b16 %v2092
        %v2382 = vunpack.c.l.b16 %v2093
        %v2383 = vunpack.c.h.b16 %v2093
        %v2384 = vunpack.c.l.b16 %v2094
        %v2385 = vunpack.c.h.b16 %v2094
        %v2386 = vunpack.c.l.b16 %v2095
        %v2387 = vunpack.c.h.b16 %v2095
        %v2388 = vunpack.c.l.b16 %v2096
        %v2389 = vunpack.c.h.b16 %v2096
        %v2390 = vunpack.c.l.b16 %v2097
        %v2391 = vunpack.c.h.b16 %v2097
        %v2392 = vunpack.c.l.b16 %v2098
        %v2393 = vunpack.c.h.b16 %v2098
        %v2394 = vunpack.c.l.b16 %v2099
        %v2395 = vunpack.c.h.b16 %v2099
        %v2396 = vunpack.c.l.b16 %v2100
        %v2397 = vunpack.c.h.b16 %v2100
        %v2398 = vunpack.c.l.b16 %v2101
        %v2399 = vunpack.c.h.b16 %v2101
        %v2400 = vunpack.c.l.b16 %v2102
        %v2401 = vunpack.c.h.b16 %v2102
        %v2402 = vunpack.c.l.b16 %v2103
        %v2403 = vunpack.c.h.b16 %v2103
        %v2404 = vunpack.c.l.b16 %v2104
        %v2405 = vunpack.c.h.b16 %v2104
        %v2406 = vunpack.c.l.b16 %v2105
        %v2407 = vunpack.c.h.b16 %v2105
        %v2408 = vunpack.c.l.b16 %v2106
        %v2409 = vunpack.c.h.b16 %v2106
        %v2410 = vunpack.c.l.b16 %v2107
        %v2411 = vunpack.c.h.b16 %v2107
        %v2412 = vunpack.c.l.b16 %v2108
        %v2413 = vunpack.c.h.b16 %v2108
        %v2414 = vunpack.c.l.b16 %v2109
        %v2415 = vunpack.c.h.b16 %v2109
        %v2416 = vunpack.c.l.b16 %v2110
        %v2417 = vunpack.c.h.b16 %v2110
        %v2418 = vunpack.c.l.b16 %v2111
        %v2419 = vunpack.c.h.b16 %v2111
        %v2420 = vunpack.c.l.b16 %v2112
        %v2421 = vunpack.c.h.b16 %v2112
        %v2422 = vunpack.c.l.b16 %v2113
        %v2423 = vunpack.c.h.b16 %v2113
        %v2424 = vunpack.c.l.b16 %v2114
        %v2425 = vunpack.c.h.b16 %v2114
        %v2426 = vunpack.c.l.b16 %v2115
        %v2427 = vunpack.c.h.b16 %v2115
        %v2428 = vunpack.c.l.b16 %v2116
        %v2429 = vunpack.c.h.b16 %v2116
        %v2430 = vunpack.c.l.b16 %v2117
        %v2431 = vunpack.c.h.b16 %v2117
        %v2432 = vunpack.c.l.b16 %v2118
        %v2433 = vunpack.c.h.b16 %v2118
        %v2434 = vunpack.c.l.b16 %v2119
        %v2435 = vunpack.c.h.b16 %v2119
        %v2436 = vunpack.c.l.b16 %v2120
        %v2437 = vunpack.c.h.b16 %v2120
        %v2438 = vunpack.c.l.b16 %v2121
        %v2439 = vunpack.c.h.b16 %v2121
        %v2440 = vunpack.c.l.b16 %v2122
        %v2441 = vunpack.c.h.b16 %v2122
        %v2442 = vunpack.c.l.b16 %v2123
        %v2443 = vunpack.c.h.b16 %v2123
        %v2444 = vunpack.c.l.b16 %v2124
        %v2445 = vunpack.c.h.b16 %v2124
        %v2446 = vunpack.c.l.b16 %v2125
        %v2447 = vunpack.c.h.b16 %v2125
        %v2448 = vunpack.c.l.b16 %v2126
        %v2449 = vunpack.c.h.b16 %v2126
        %v2450 = vunpack.c.l.b16 %v2127
        %v2451 = vunpack.c.h.b16 %v2127
        %v2452 = vunpack.c.l.b16 %v2128
        %v2453 = vunpack.c.h.b16 %v2128
        %v2454 = vunpack.c.l.b16 %v2129
        %v2455 = vunpack.c.h.b16 %v2129
        %v2456 = vunpack.c.l.b16 %v2130
        %v2457 = vunpack.c.h.b16 %v2130
        %v2458 = vunpack.c.l.b16 %v2131
        %v2459 = vunpack.c.h.b16 %v2131
        %v2460 = vunpack.c.l.b16 %v2132
        %v2461 = vunpack.c.h.b16 %v2132
        %v2462 = vunpack.c.l.b16 %v2133
        %v2463 = vunpack.c.h.b16 %v2133
        %v2464 = vunpack.c.l.b16 %v2134
        %v2465 = vunpack.c.h.b16 %v2134
        %v2466 = vunpack.c.l.b16 %v2135
        %v2467 = vunpack.c.h.b16 %v2135
        %v2468 = vunpack.c.l.b16 %v2136
        %v2469 = vunpack.c.h.b16 %v2136
        %v2470 = vunpack.c.l.b16 %v2137
        %v2471 = vunpack.c.h.b16 %v2137
        %v2472 = vunpack.c.l.b16 %v2138
        %v2473 = vunpack.c.h.b16 %v2138
        %v2474 = vunpack.c.l.b16 %v2139
        %v2475 = vunpack.c.h.b16 %v2139
        %v2476 = vunpack.c.l.b16 %v2140
        %v2477 = vunpack.c.h.b16 %v2140
        %v2478 = vunpack.c.l.b16 %v2141
        %v2479 = vunpack.c.h.b16 %v2141
        %v2480 = vunpack.c.l.b16 %v2142
        %v2481 = vunpack.c.h.b16 %v2142
        %v2482 = vunpack.c.l.b16 %v2143
        %v2483 = vunpack.c.h.b16 %v2143
        %v2484 = vunpack.c.l.b16 %v2144
        %v2485 = vunpack.c.h.b16 %v2144
        %v2486 = vunpack.c.l.b16 %v2145
        %v2487 = vunpack.c.h.b16 %v2145
        %v2488 = vunpack.c.l.b16 %v2146
        %v2489 = vunpack.c.h.b16 %v2146
        %v2490 = vunpack.c.l.b16 %v2147
        %v2491 = vunpack.c.h.b16 %v2147
        %v2492 = vunpack.c.l.b16 %v2148
        %v2493 = vunpack.c.h.b16 %v2148
        %v2494 = vunpack.c.l.b16 %v2149
        %v2495 = vunpack.c.h.b16 %v2149
        %v2496 = vunpack.c.l.b16 %v2150
        %v2497 = vunpack.c.h.b16 %v2150
        %v2498 = vunpack.c.l.b16 %v2151
        %v2499 = vunpack.c.h.b16 %v2151
        %v2500 = vunpack.c.l.b16 %v2152
        %v2501 = vunpack.c.h.b16 %v2152
        %v2502 = vunpack.c.l.b16 %v2153
        %v2503 = vunpack.c.h.b16 %v2153
        %v2504 = vunpack.c.l.b16 %v2154
        %v2505 = vunpack.c.h.b16 %v2154
        %v2506 = vunpack.c.l.b16 %v2155
        %v2507 = vunpack.c.h.b16 %v2155
        %v2508 = vunpack.c.l.b16 %v2156
        %v2509 = vunpack.c.h.b16 %v2156
        %v2510 = vunpack.c.l.b16 %v2157
        %v2511 = vunpack.c.h.b16 %v2157
        %v2512 = vunpack.c.l.b16 %v2158
        %v2513 = vunpack.c.h.b16 %v2158
        %v2514 = vunpack.c.l.b16 %v2159
        %v2515 = vunpack.c.h.b16 %v2159
        %v2516 = vunpack.c.l.b16 %v2160
        %v2517 = vunpack.c.h.b16 %v2160
        %v2518 = vunpack.c.l.b16 %v2161
        %v2519 = vunpack.c.h.b16 %v2161
        %v2520 = vunpack.c.l.b16 %v2162
        %v2521 = vunpack.c.h.b16 %v2162
        %v2522 = vunpack.c.l.b16 %v2163
        %v2523 = vunpack.c.h.b16 %v2163
        %v2524 = vunpack.c.l.b16 %v2164
        %v2525 = vunpack.c.h.b16 %v2164
        %v2526 = vunpack.c.l.b16 %v2165
        %v2527 = vunpack.c.h.b16 %v2165
        %v2528 = vunpack.c.l.b16 %v2166
        %v2529 = vunpack.c.h.b16 %v2166
        %v2530 = vunpack.c.l.b16 %v2167
        %v2531 = vunpack.c.h.b16 %v2167
        %v2532 = vunpack.c.l.b16 %v2168
        %v2533 = vunpack.c.h.b16 %v2168
        %v2534 = vunpack.c.l.b16 %v2169
        %v2535 = vunpack.c.h.b16 %v2169
        %v2536 = vunpack.c.l.b16 %v2170
        %v2537 = vunpack.c.h.b16 %v2170
        %v2538 = vunpack.c.l.b16 %v2171
        %v2539 = vunpack.c.h.b16 %v2171
        %v2540 = vunpack.c.l.b16 %v2172
        %v2541 = vunpack.c.h.b16 %v2172
        %v2542 = vunpack.c.l.b16 %v2173
        %v2543 = vunpack.c.h.b16 %v2173
        %v2544 = vunpack.c.l.b16 %v2174
        %v2545 = vunpack.c.h.b16 %v2174
        %v2546 = vunpack.c.l.b16 %v2175
        %v2547 = vunpack.c.h.b16 %v2175
        %v2548 = vunpack.c.l.b16 %v2176
        %v2549 = vunpack.c.h.b16 %v2176
        %v2550 = vunpack.c.l.b16 %v2177
        %v2551 = vunpack.c.h.b16 %v2177
        %v2552 = vunpack.c.l.b16 %v2178
        %v2553 = vunpack.c.h.b16 %v2178
        %v2554 = vunpack.c.l.b16 %v2179
        %v2555 = vunpack.c.h.b16 %v2179
        %v2556 = vunpack.c.l.b16 %v2180
        %v2557 = vunpack.c.h.b16 %v2180
        %v2558 = vunpack.c.l.b16 %v2181
        %v2559 = vunpack.c.h.b16 %v2181
        %v2560 = vunpack.c.l.b16 %v2182
        %v2561 = vunpack.c.h.b16 %v2182
        %v2562 = vunpack.c.l.b16 %v2183
        %v2563 = vunpack.c.h.b16 %v2183
        %v2564 = vunpack.c.l.b16 %v2184
        %v2565 = vunpack.c.h.b16 %v2184
        %v2566 = vunpack.c.l.b16 %v2185
        %v2567 = vunpack.c.h.b16 %v2185
        %v2568 = vunpack.c.l.b16 %v2186
        %v2569 = vunpack.c.h.b16 %v2186
        %v2570 = vunpack.c.l.b16 %v2187
        %v2571 = vunpack.c.h.b16 %v2187
        %v2572 = vunpack.c.l.b16 %v2188
        %v2573 = vunpack.c.h.b16 %v2188
        %v2574 = vunpack.c.l.b16 %v2189
        %v2575 = vunpack.c.h.b16 %v2189
        %v2576 = vunpack.c.l.b16 %v2190
        %v2577 = vunpack.c.h.b16 %v2190
        %v2578 = vunpack.c.l.b16 %v2191
        %v2579 = vunpack.c.h.b16 %v2191
        %v2580 = vunpack.c.l.b16 %v2192
        %v2581 = vunpack.c.h.b16 %v2192
        %v2582 = vunpack.c.l.b16 %v2193
        %v2583 = vunpack.c.h.b16 %v2193
        %v2584 = vunpack.c.l.b16 %v2194
        %v2585 = vunpack.c.h.b16 %v2194
        %v2586 = vunpack.c.l.b16 %v2195
        %v2587 = vunpack.c.h.b16 %v2195
        %v2588 = vunpack.c.l.b16 %v2196
        %v2589 = vunpack.c.h.b16 %v2196
        %v2590 = vunpack.c.l.b16 %v2197
        %v2591 = vunpack.c.h.b16 %v2197
        %v2592 = vunpack.c.l.b16 %v2198
        %v2593 = vunpack.c.h.b16 %v2198
        %v2594 = vunpack.c.l.b16 %v2199
        %v2595 = vunpack.c.h.b16 %v2199
        %v2596 = vunpack.c.l.b16 %v2200
        %v2597 = vunpack.c.h.b16 %v2200
        %v2598 = vunpack.c.l.b16 %v2201
        %v2599 = vunpack.c.h.b16 %v2201
        %v2600 = vunpack.c.l.b16 %v2202
        %v2601 = vunpack.c.h.b16 %v2202
        %v2602 = vunpack.c.l.b16 %v2203
        %v2603 = vunpack.c.h.b16 %v2203
        %v2604 = vunpack.c.l.b16 %v2204
        %v2605 = vunpack.c.h.b16 %v2204
        %v2606 = vunpack.c.l.b16 %v2205
        %v2607 = vunpack.c.h.b16 %v2205
        %v2608 = vunpack.c.l.b16 %v2206
        %v2609 = vunpack.c.h.b16 %v2206
        %v2610 = vunpack.c.l.b16 %v2207
        %v2611 = vunpack.c.h.b16 %v2207
        %v2612 = vunpack.c.l.b16 %v2208
        %v2613 = vunpack.c.h.b16 %v2208
        %v2614 = vunpack.c.l.b16 %v2209
        %v2615 = vunpack.c.h.b16 %v2209
        %v2616 = vpack.c.b16 %v2364, %v2360
        %v2617 = vpack.c.b16 %v2365, %v2361
        %v2618 = vpack.c.b16 %v2366, %v2362
        %v2619 = vpack.c.b16 %v2367, %v2363
        %v2620 = vpack.c.b16 %v2372, %v2368
        %v2621 = vpack.c.b16 %v2373, %v2369
        %v2622 = vpack.c.b16 %v2374, %v2370
        %v2623 = vpack.c.b16 %v2375, %v2371
        %v2624 = vpack.c.b16 %v2380, %v2376
        %v2625 = vpack.c.b16 %v2381, %v2377
        %v2626 = vpack.c.b16 %v2382, %v2378
        %v2627 = vpack.c.b16 %v2383, %v2379
        %v2628 = vpack.c.b16 %v2388, %v2384
        %v2629 = vpack.c.b16 %v2389, %v2385
        %v2630 = vpack.c.b16 %v2390, %v2386
        %v2631 = vpack.c.b16 %v2391, %v2387
        %v2632 = vpack.c.b16 %v2396, %v2392
        %v2633 = vpack.c.b16 %v2397, %v2393
        %v2634 = vpack.c.b16 %v2398, %v2394
        %v2635 = vpack.c.b16 %v2399, %v2395
        %v2636 = vpack.c.b16 %v2404, %v2400
        %v2637 = vpack.c.b16 %v2405, %v2401
        %v2638 = vpack.c.b16 %v2406, %v2402
        %v2639 = vpack.c.b16 %v2407, %v2403
        %v2640 = vpack.c.b16 %v2412, %v2408
        %v2641 = vpack.c.b16 %v2413, %v2409
        %v2642 = vpack.c.b16 %v2414, %v2410
        %v2643 = vpack.c.b16 %v2415, %v2411
        %v2644 = vpack.c.b16 %v2420, %v2416
        %v2645 = vpack.c.b16 %v2421, %v2417
        %v2646 = vpack.c.b16 %v2422, %v2418
        %v2647 = vpack.c.b16 %v2423, %v2419
        %v2648 = vpack.c.b16 %v2428, %v2424
        %v2649 = vpack.c.b16 %v2429, %v2425
        %v2650 = vpack.c.b16 %v2430, %v2426
        %v2651 = vpack.c.b16 %v2431, %v2427
        %v2652 = vpack.c.b16 %v2436, %v2432
        %v2653 = vpack.c.b16 %v2437, %v2433
        %v2654 = vpack.c.b16 %v2438, %v2434
        %v2655 = vpack.c.b16 %v2439, %v2435
        %v2656 = vpack.c.b16 %v2444, %v2440
        %v2657 = vpack.c.b16 %v2445, %v2441
        %v2658 = vpack.c.b16 %v2446, %v2442
        %v2659 = vpack.c.b16 %v2447, %v2443
        %v2660 = vpack.c.b16 %v2452, %v2448
        %v2661 = vpack.c.b16 %v2453, %v2449
        %v2662 = vpack.c.b16 %v2454, %v2450
        %v2663 = vpack.c.b16 %v2455, %v2451
        %v2664 = vpack.c.b16 %v2460, %v2456
        %v2665 = vpack.c.b16 %v2461, %v2457
        %v2666 = vpack.c.b16 %v2462, %v2458
        %v2667 = vpack.c.b16 %v2463, %v2459
        %v2668 = vpack.c.b16 %v2468, %v2464
        %v2669 = vpack.c.b16 %v2469, %v2465
        %v2670 = vpack.c.b16 %v2470, %v2466
        %v2671 = vpack.c.b16 %v2471, %v2467
        %v2672 = vpack.c.b16 %v2476, %v2472
        %v2673 = vpack.c.b16 %v2477, %v2473
        %v2674 = vpack.c.b16 %v2478, %v2474
        %v2675 = vpack.c.b16 %v2479, %v2475
        %v2676 = vpack.c.b16 %v2484, %v2480
        %v2677 = vpack.c.b16 %v2485, %v2481
        %v2678 = vpack.c.b16 %v2486, %v2482
        %v2679 = vpack.c.b16 %v2487, %v2483
        %v2680 = vpack.c.b16 %v2492, %v2488
        %v2681 = vpack.c.b16 %v2493, %v2489
        %v2682 = vpack.c.b16 %v2494, %v2490
        %v2683 = vpack.c.b16 %v2495, %v2491
        %v2684 = vpack.c.b16 %v2500, %v2496
        %v2685 = vpack.c.b16 %v2501, %v2497
        %v2686 = vpack.c.b16 %v2502, %v2498
        %v2687 = vpack.c.b16 %v2503, %v2499
        %v2688 = vpack.c.b16 %v2508, %v2504
        %v2689 = vpack.c.b16 %v2509, %v2505
        %v2690 = vpack.c.b16 %v2510, %v2506
        %v2691 = vpack.c.b16 %v2511, %v2507
        %v2692 = vpack.c.b16 %v2516, %v2512
        %v2693 = vpack.c.b16 %v2517, %v2513
        %v2694 = vpack.c.b16 %v2518, %v2514
        %v2695 = vpack.c.b16 %v2519, %v2515
        %v2696 = vpack.c.b16 %v2524, %v2520
        %v2697 = vpack.c.b16 %v2525, %v2521
        %v2698 = vpack.c.b16 %v2526, %v2522
        %v2699 = vpack.c.b16 %v2527, %v2523
        %v2700 = vpack.c.b16 %v2532, %v2528
        %v2701 = vpack.c.b16 %v2533, %v2529
        %v2702 = vpack.c.b16 %v2534, %v2530
        %v2703 = vpack.c.b16 %v2535, %v2531
        %v2704 = vpack.c.b16 %v2540, %v2536
        %v2705 = vpack.c.b16 %v2541, %v2537
        %v2706 = vpack.c.b16 %v2542, %v2538
        %v2707 = vpack.c.b16 %v2543, %v2539
        %v2708 = vpack.c.b16 %v2548, %v2544
        %v2709 = vpack.c.b16 %v2549, %v2545
        %v2710 = vpack.c.b16 %v2550, %v2546
        %v2711 = vpack.c.b16 %v2551, %v2547
        %v2712 = vpack.c.b16 %v2556, %v2552
        %v2713 = vpack.c.b16 %v2557, %v2553
        %v2714 = vpack.c.b16 %v2558, %v2554
        %v2715 = vpack.c.b16 %v2559, %v2555
        %v2716 = vpack.c.b16 %v2564, %v2560
        %v2717 = vpack.c.b16 %v2565, %v2561
        %v2718 = vpack.c.b16 %v2566, %v2562
        %v2719 = vpack.c.b16 %v2567, %v2563
        %v2720 = vpack.c.b16 %v2572, %v2568
        %v2721 = vpack.c.b16 %v2573, %v2569
        %v2722 = vpack.c.b16 %v2574, %v2570
        %v2723 = vpack.c.b16 %v2575, %v2571
        %v2724 = vpack.c.b16 %v2580, %v2576
        %v2725 = vpack.c.b16 %v2581, %v2577
        %v2726 = vpack.c.b16 %v2582, %v2578
        %v2727 = vpack.c.b16 %v2583, %v2579
        %v2728 = vpack.c.b16 %v2588, %v2584
        %v2729 = vpack.c.b16 %v2589, %v2585
        %v2730 = vpack.c.b16 %v2590, %v2586
        %v2731 = vpack.c.b16 %v2591, %v2587
        %v2732 = vpack.c.b16 %v2596, %v2592
        %v2733 = vpack.c.b16 %v2597, %v2593
        %v2734 = vpack.c.b16 %v2598, %v2594
        %v2735 = vpack.c.b16 %v2599, %v2595
        %v2736 = vpack.c.b16 %v2604, %v2600
        %v2737 = vpack.c.b16 %v2605, %v2601
        %v2738 = vpack.c.b16 %v2606, %v2602
        %v2739 = vpack.c.b16 %v2607, %v2603
        %v2740 = vpack.c.b16 %v2612, %v2608
        %v2741 = vpack.c.b16 %v2613, %v2609
        %v2742 = vpack.c.b16 %v2614, %v2610
        %v2743 = vpack.c.b16 %v2615, %v2611
        %2872 = vmatprep.subr.bf16.mxu0 %v2617
        %2873 = vmatpush1.bf16.msra.mxu0 %v2616
        %2874 = vmatprep.subr.bf16.mxu0 %v2621
        %2875 = vmatpush1.bf16.msra.mxu0 %v2620
        %2876 = vmatprep.subr.bf16.mxu0 %v2625
        %2877 = vmatpush1.bf16.msra.mxu0 %v2624
        %2878 = vmatprep.subr.bf16.mxu0 %v2629
        %2879 = vmatpush1.bf16.msra.mxu0 %v2628
        %2880 = vmatprep.subr.bf16.mxu0 %v2633
        %2881 = vmatpush1.bf16.msra.mxu0 %v2632
        %2882 = vmatprep.subr.bf16.mxu0 %v2637
        %2883 = vmatpush1.bf16.msra.mxu0 %v2636
        %2884 = vmatprep.subr.bf16.mxu0 %v2641
        %2885 = vmatpush1.bf16.msra.mxu0 %v2640
        %2886 = vmatprep.subr.bf16.mxu0 %v2645
        %2887 = vmatpush1.bf16.msra.mxu0 %v2644
        %2888 = vmatprep.subr.bf16.mxu0 %v2649
        %2889 = vmatpush1.bf16.msra.mxu0 %v2648
        %2890 = vmatprep.subr.bf16.mxu0 %v2653
        %2891 = vmatpush1.bf16.msra.mxu0 %v2652
        %2892 = vmatprep.subr.bf16.mxu0 %v2657
        %2893 = vmatpush1.bf16.msra.mxu0 %v2656
        %2894 = vmatprep.subr.bf16.mxu0 %v2661
        %2895 = vmatpush1.bf16.msra.mxu0 %v2660
        %2896 = vmatprep.subr.bf16.mxu0 %v2665
        %2897 = vmatpush1.bf16.msra.mxu0 %v2664
        %2898 = vmatprep.subr.bf16.mxu0 %v2669
        %2899 = vmatpush1.bf16.msra.mxu0 %v2668
        %2900 = vmatprep.subr.bf16.mxu0 %v2673
        %2901 = vmatpush1.bf16.msra.mxu0 %v2672
        %2902 = vmatprep.subr.bf16.mxu0 %v2677
        %2903 = vmatpush1.bf16.msra.mxu0 %v2676
        %2904 = vmatprep.mubr.bf16.mxu0 %v2079
        %2905 = vmatmul.mubr.bf16.gmra.mrb[0].mxu0 %v2078
        %v2906 = vpop.f32.mrb[0].mxu0
        %v2907 = vadd.f32 %v2215, %v2906
        %v2908 = vpop.f32.mrb[0].mxu0
        %v2909 = vadd.f32 %v2219, %v2908
        %v2910 = vpop.f32.mrb[0].mxu0
        %v2911 = vadd.f32 %v2215, %v2910
        %v2912 = vpop.f32.mrb[0].mxu0
        %v2913 = vadd.f32 %v2219, %v2912
        %2914 = vdwg.mxu0
        %2915 = vmatprep.subr.bf16.mxu0 %v2681
        %2916 = vmatpush1.bf16.msra.mxu0 %v2680
        %2917 = vmatprep.subr.bf16.mxu0 %v2685
        %2918 = vmatpush1.bf16.msra.mxu0 %v2684
        %2919 = vmatprep.subr.bf16.mxu0 %v2689
        %2920 = vmatpush1.bf16.msra.mxu0 %v2688
        %2921 = vmatprep.subr.bf16.mxu0 %v2693
        %2922 = vmatpush1.bf16.msra.mxu0 %v2692
        %2923 = vmatprep.subr.bf16.mxu0 %v2697
        %2924 = vmatpush1.bf16.msra.mxu0 %v2696
        %2925 = vmatprep.subr.bf16.mxu0 %v2701
        %2926 = vmatpush1.bf16.msra.mxu0 %v2700
        %2927 = vmatprep.subr.bf16.mxu0 %v2705
        %2928 = vmatpush1.bf16.msra.mxu0 %v2704
        %2929 = vmatprep.subr.bf16.mxu0 %v2709
        %2930 = vmatpush1.bf16.msra.mxu0 %v2708
        %2931 = vmatprep.subr.bf16.mxu0 %v2713
        %2932 = vmatpush1.bf16.msra.mxu0 %v2712
        %2933 = vmatprep.subr.bf16.mxu0 %v2717
        %2934 = vmatpush1.bf16.msra.mxu0 %v2716
        %2935 = vmatprep.subr.bf16.mxu0 %v2721
        %2936 = vmatpush1.bf16.msra.mxu0 %v2720
        %2937 = vmatprep.subr.bf16.mxu0 %v2725
        %2938 = vmatpush1.bf16.msra.mxu0 %v2724
        %2939 = vmatprep.subr.bf16.mxu0 %v2729
        %2940 = vmatpush1.bf16.msra.mxu0 %v2728
        %2941 = vmatprep.subr.bf16.mxu0 %v2733
        %2942 = vmatpush1.bf16.msra.mxu0 %v2732
        %2943 = vmatprep.subr.bf16.mxu0 %v2737
        %2944 = vmatpush1.bf16.msra.mxu0 %v2736
        %2945 = vmatprep.subr.bf16.mxu0 %v2741
        %2946 = vmatpush1.bf16.msra.mxu0 %v2740
        %2947 = vmatprep.mubr.bf16.mxu0 %v2081
        %2948 = vmatmul.mubr.bf16.gmra.mrb[0].mxu0 %v2080
        %v2949 = vpop.f32.mrb[0].mxu0
        %v2950 = vadd.f32 %v2907, %v2949
        %v2951 = vpop.f32.mrb[0].mxu0
        %v2952 = vadd.f32 %v2909, %v2951
        %v2953 = vpop.f32.mrb[0].mxu0
        %v2954 = vadd.f32 %v2911, %v2953
        %v2955 = vpop.f32.mrb[0].mxu0
        %v2956 = vadd.f32 %v2913, %v2955
        %2957 = vdwg.mxu0
        %2958 = vmatprep.subr.bf16.mxu0 %v2619
        %2959 = vmatpush1.bf16.msra.mxu0 %v2618
        %2960 = vmatprep.subr.bf16.mxu0 %v2623
        %2961 = vmatpush1.bf16.msra.mxu0 %v2622
        %2962 = vmatprep.subr.bf16.mxu0 %v2627
        %2963 = vmatpush1.bf16.msra.mxu0 %v2626
        %2964 = vmatprep.subr.bf16.mxu0 %v2631
        %2965 = vmatpush1.bf16.msra.mxu0 %v2630
        %2966 = vmatprep.subr.bf16.mxu0 %v2635
        %2967 = vmatpush1.bf16.msra.mxu0 %v2634
        %2968 = vmatprep.subr.bf16.mxu0 %v2639
        %2969 = vmatpush1.bf16.msra.mxu0 %v2638
        %2970 = vmatprep.subr.bf16.mxu0 %v2643
        %2971 = vmatpush1.bf16.msra.mxu0 %v2642
        %2972 = vmatprep.subr.bf16.mxu0 %v2647
        %2973 = vmatpush1.bf16.msra.mxu0 %v2646
        %2974 = vmatprep.subr.bf16.mxu0 %v2651
        %2975 = vmatpush1.bf16.msra.mxu0 %v2650
        %2976 = vmatprep.subr.bf16.mxu0 %v2655
        %2977 = vmatpush1.bf16.msra.mxu0 %v2654
        %2978 = vmatprep.subr.bf16.mxu0 %v2659
        %2979 = vmatpush1.bf16.msra.mxu0 %v2658
        %2980 = vmatprep.subr.bf16.mxu0 %v2663
        %2981 = vmatpush1.bf16.msra.mxu0 %v2662
        %2982 = vmatprep.subr.bf16.mxu0 %v2667
        %2983 = vmatpush1.bf16.msra.mxu0 %v2666
        %2984 = vmatprep.subr.bf16.mxu0 %v2671
        %2985 = vmatpush1.bf16.msra.mxu0 %v2670
        %2986 = vmatprep.subr.bf16.mxu0 %v2675
        %2987 = vmatpush1.bf16.msra.mxu0 %v2674
        %2988 = vmatprep.subr.bf16.mxu0 %v2679
        %2989 = vmatpush1.bf16.msra.mxu0 %v2678
        %2990 = vmatprep.mubr.bf16.mxu0 %v2079
        %2991 = vmatmul.mubr.bf16.gmra.mrb[0].mxu0 %v2078
        %v2992 = vpop.f32.mrb[0].mxu0
        %v2993 = vadd.f32 %v2223, %v2992
        %v2994 = vpop.f32.mrb[0].mxu0
        %v2995 = vadd.f32 %v2227, %v2994
        %v2996 = vpop.f32.mrb[0].mxu0
        %v2997 = vadd.f32 %v2223, %v2996
        %v2998 = vpop.f32.mrb[0].mxu0
        %v2999 = vadd.f32 %v2227, %v2998
        %3000 = vdwg.mxu0
        %3001 = vmatprep.subr.bf16.mxu0 %v2683
        %3002 = vmatpush1.bf16.msra.mxu0 %v2682
        %3003 = vmatprep.subr.bf16.mxu0 %v2687
        %3004 = vmatpush1.bf16.msra.mxu0 %v2686
        %3005 = vmatprep.subr.bf16.mxu0 %v2691
        %3006 = vmatpush1.bf16.msra.mxu0 %v2690
        %3007 = vmatprep.subr.bf16.mxu0 %v2695
        %3008 = vmatpush1.bf16.msra.mxu0 %v2694
        %3009 = vmatprep.subr.bf16.mxu0 %v2699
        %3010 = vmatpush1.bf16.msra.mxu0 %v2698
        %3011 = vmatprep.subr.bf16.mxu0 %v2703
        %3012 = vmatpush1.bf16.msra.mxu0 %v2702
        %3013 = vmatprep.subr.bf16.mxu0 %v2707
        %3014 = vmatpush1.bf16.msra.mxu0 %v2706
        %3015 = vmatprep.subr.bf16.mxu0 %v2711
        %3016 = vmatpush1.bf16.msra.mxu0 %v2710
        %3017 = vmatprep.subr.bf16.mxu0 %v2715
        %3018 = vmatpush1.bf16.msra.mxu0 %v2714
        %3019 = vmatprep.subr.bf16.mxu0 %v2719
        %3020 = vmatpush1.bf16.msra.mxu0 %v2718
        %3021 = vmatprep.subr.bf16.mxu0 %v2723
        %3022 = vmatpush1.bf16.msra.mxu0 %v2722
        %3023 = vmatprep.subr.bf16.mxu0 %v2727
        %3024 = vmatpush1.bf16.msra.mxu0 %v2726
        %3025 = vmatprep.subr.bf16.mxu0 %v2731
        %3026 = vmatpush1.bf16.msra.mxu0 %v2730
        %3027 = vmatprep.subr.bf16.mxu0 %v2735
        %3028 = vmatpush1.bf16.msra.mxu0 %v2734
        %3029 = vmatprep.subr.bf16.mxu0 %v2739
        %3030 = vmatpush1.bf16.msra.mxu0 %v2738
        %3031 = vmatprep.subr.bf16.mxu0 %v2743
        %3032 = vmatpush1.bf16.msra.mxu0 %v2742
        %3033 = vmatprep.mubr.bf16.mxu0 %v2081
        %3034 = vmatmul.mubr.bf16.gmra.mrb[0].mxu0 %v2080
        %v3035 = vpop.f32.mrb[0].mxu0
        %v3036 = vadd.f32 %v2993, %v3035
        %v3037 = vpop.f32.mrb[0].mxu0
        %v3038 = vadd.f32 %v2995, %v3037
        %v3039 = vpop.f32.mrb[0].mxu0
        %v3040 = vadd.f32 %v2997, %v3039
        %v3041 = vpop.f32.mrb[0].mxu0
        %v3042 = vadd.f32 %v2999, %v3041
        %3043 = vdwg.mxu0
        %v3044 = vmax.f32 %v2950, 0.0
        %v3045 = vmax.f32 %v2952, 0.0
        %v3046 = vmax.f32 %v3036, 0.0
        %v3047 = vmax.f32 %v3038, 0.0
        %v3048 = vmax.f32 %v2954, 0.0
        %v3049 = vmax.f32 %v2956, 0.0
        %v3050 = vmax.f32 %v3040, 0.0
        %v3051 = vmax.f32 %v3042, 0.0
        %v3052 = vpack.c.bf16 %v3048, %v3044
        %v3053 = vpack.c.bf16 %v3049, %v3045
        %v3054 = vpack.c.bf16 %v3050, %v3046
        %v3055 = vpack.c.bf16 %v3051, %v3047
        %v3056 = vld [vmem:[%s5] sm:$0xf]
        %v3057 = vld [vmem:[%s5 + $0x4] sm:$0xf]
        %v3058 = vld [vmem:[%s5 + $0x8] sm:$0xf]
        %v3059 = vld [vmem:[%s5 + $0xc] sm:$0xf]
        %v3060 = vld [vmem:[%s5 + $0x10] sm:$0xf]
        %v3061 = vld [vmem:[%s5 + $0x14] sm:$0xf]
        %v3062 = vld [vmem:[%s5 + $0x18] sm:$0xf]
        %v3063 = vld [vmem:[%s5 + $0x1c] sm:$0xf]
        %v3064 = vld [vmem:[%s5 + $0x20] sm:$0xf]
        %v3065 = vld [vmem:[%s5 + $0x24] sm:$0xf]
        %v3066 = vld [vmem:[%s5 + $0x28] sm:$0xf]
        %v3067 = vld [vmem:[%s5 + $0x2c] sm:$0xf]
        %v3068 = vld [vmem:[%s5 + $0x30] sm:$0xf]
        %v3069 = vld [vmem:[%s5 + $0x34] sm:$0xf]
        %v3070 = vld [vmem:[%s5 + $0x38] sm:$0xf]
        %v3071 = vld [vmem:[%s5 + $0x3c] sm:$0xf]
        %v3072 = vld [vmem:[%s5 + $0x40] sm:$0xf]
        %v3073 = vld [vmem:[%s5 + $0x44] sm:$0xf]
        %v3074 = vld [vmem:[%s5 + $0x48] sm:$0xf]
        %v3075 = vld [vmem:[%s5 + $0x4c] sm:$0xf]
        %v3076 = vld [vmem:[%s5 + $0x50] sm:$0xf]
        %v3077 = vld [vmem:[%s5 + $0x54] sm:$0xf]
        %v3078 = vld [vmem:[%s5 + $0x58] sm:$0xf]
        %v3079 = vld [vmem:[%s5 + $0x5c] sm:$0xf]
        %v3080 = vld [vmem:[%s5 + $0x60] sm:$0xf]
        %v3081 = vld [vmem:[%s5 + $0x64] sm:$0xf]
        %v3082 = vld [vmem:[%s5 + $0x68] sm:$0xf]
        %v3083 = vld [vmem:[%s5 + $0x6c] sm:$0xf]
        %v3084 = vld [vmem:[%s5 + $0x70] sm:$0xf]
        %v3085 = vld [vmem:[%s5 + $0x74] sm:$0xf]
        %v3086 = vld [vmem:[%s5 + $0x78] sm:$0xf]
        %v3087 = vld [vmem:[%s5 + $0x7c] sm:$0xf]
        %v3088 = vld [vmem:[%s5 + $0x80] sm:$0xf]
        %v3089 = vld [vmem:[%s5 + $0x84] sm:$0xf]
        %v3090 = vld [vmem:[%s5 + $0x88] sm:$0xf]
        %v3091 = vld [vmem:[%s5 + $0x8c] sm:$0xf]
        %v3092 = vld [vmem:[%s5 + $0x90] sm:$0xf]
        %v3093 = vld [vmem:[%s5 + $0x94] sm:$0xf]
        %v3094 = vld [vmem:[%s5 + $0x98] sm:$0xf]
        %v3095 = vld [vmem:[%s5 + $0x9c] sm:$0xf]
        %v3096 = vld [vmem:[%s5 + $0xa0] sm:$0xf]
        %v3097 = vld [vmem:[%s5 + $0xa4] sm:$0xf]
        %v3098 = vld [vmem:[%s5 + $0xa8] sm:$0xf]
        %v3099 = vld [vmem:[%s5 + $0xac] sm:$0xf]
        %v3100 = vld [vmem:[%s5 + $0xb0] sm:$0xf]
        %v3101 = vld [vmem:[%s5 + $0xb4] sm:$0xf]
        %v3102 = vld [vmem:[%s5 + $0xb8] sm:$0xf]
        %v3103 = vld [vmem:[%s5 + $0xbc] sm:$0xf]
        %v3104 = vld [vmem:[%s5 + $0xc0] sm:$0xf]
        %v3105 = vld [vmem:[%s5 + $0xc4] sm:$0xf]
        %v3106 = vld [vmem:[%s5 + $0xc8] sm:$0xf]
        %v3107 = vld [vmem:[%s5 + $0xcc] sm:$0xf]
        %v3108 = vld [vmem:[%s5 + $0xd0] sm:$0xf]
        %v3109 = vld [vmem:[%s5 + $0xd4] sm:$0xf]
        %v3110 = vld [vmem:[%s5 + $0xd8] sm:$0xf]
        %v3111 = vld [vmem:[%s5 + $0xdc] sm:$0xf]
        %v3112 = vld [vmem:[%s5 + $0xe0] sm:$0xf]
        %v3113 = vld [vmem:[%s5 + $0xe4] sm:$0xf]
        %v3114 = vld [vmem:[%s5 + $0xe8] sm:$0xf]
        %v3115 = vld [vmem:[%s5 + $0xec] sm:$0xf]
        %v3116 = vld [vmem:[%s5 + $0xf0] sm:$0xf]
        %v3117 = vld [vmem:[%s5 + $0xf4] sm:$0xf]
        %v3118 = vld [vmem:[%s5 + $0xf8] sm:$0xf]
        %v3119 = vld [vmem:[%s5 + $0xfc] sm:$0xf]
        %v3120 = vld [vmem:[%s6] sm:$0x1]
        %v3122 = vlaneseq
        %v3123 = vshrl.u32 %v3122, 7
        %v3124 = vsub.s32 0, %v3123
        %v3125 = vrot.slane %v3120, %v3124
        %v3191 = vunpack.c.l.b16 %v3056
        %v3192 = vunpack.c.l.b16 %v3057
        %v3193 = vunpack.c.l.b16 %v3058
        %v3194 = vunpack.c.l.b16 %v3059
        %v3195 = vunpack.c.l.b16 %v3060
        %v3196 = vunpack.c.l.b16 %v3061
        %v3197 = vunpack.c.l.b16 %v3062
        %v3198 = vunpack.c.l.b16 %v3063
        %v3199 = vunpack.c.l.b16 %v3064
        %v3200 = vunpack.c.l.b16 %v3065
        %v3201 = vunpack.c.l.b16 %v3066
        %v3202 = vunpack.c.l.b16 %v3067
        %v3203 = vunpack.c.l.b16 %v3068
        %v3204 = vunpack.c.l.b16 %v3069
        %v3205 = vunpack.c.l.b16 %v3070
        %v3206 = vunpack.c.l.b16 %v3071
        %v3207 = vunpack.c.l.b16 %v3072
        %v3208 = vunpack.c.l.b16 %v3073
        %v3209 = vunpack.c.l.b16 %v3074
        %v3210 = vunpack.c.l.b16 %v3075
        %v3211 = vunpack.c.l.b16 %v3076
        %v3212 = vunpack.c.l.b16 %v3077
        %v3213 = vunpack.c.l.b16 %v3078
        %v3214 = vunpack.c.l.b16 %v3079
        %v3215 = vunpack.c.l.b16 %v3080
        %v3216 = vunpack.c.l.b16 %v3081
        %v3217 = vunpack.c.l.b16 %v3082
        %v3218 = vunpack.c.l.b16 %v3083
        %v3219 = vunpack.c.l.b16 %v3084
        %v3220 = vunpack.c.l.b16 %v3085
        %v3221 = vunpack.c.l.b16 %v3086
        %v3222 = vunpack.c.l.b16 %v3087
        %v3223 = vunpack.c.l.b16 %v3088
        %v3224 = vunpack.c.l.b16 %v3089
        %v3225 = vunpack.c.l.b16 %v3090
        %v3226 = vunpack.c.l.b16 %v3091
        %v3227 = vunpack.c.l.b16 %v3092
        %v3228 = vunpack.c.l.b16 %v3093
        %v3229 = vunpack.c.l.b16 %v3094
        %v3230 = vunpack.c.l.b16 %v3095
        %v3231 = vunpack.c.l.b16 %v3096
        %v3232 = vunpack.c.l.b16 %v3097
        %v3233 = vunpack.c.l.b16 %v3098
        %v3234 = vunpack.c.l.b16 %v3099
        %v3235 = vunpack.c.l.b16 %v3100
        %v3236 = vunpack.c.l.b16 %v3101
        %v3237 = vunpack.c.l.b16 %v3102
        %v3238 = vunpack.c.l.b16 %v3103
        %v3239 = vunpack.c.l.b16 %v3104
        %v3240 = vunpack.c.l.b16 %v3105
        %v3241 = vunpack.c.l.b16 %v3106
        %v3242 = vunpack.c.l.b16 %v3107
        %v3243 = vunpack.c.l.b16 %v3108
        %v3244 = vunpack.c.l.b16 %v3109
        %v3245 = vunpack.c.l.b16 %v3110
        %v3246 = vunpack.c.l.b16 %v3111
        %v3247 = vunpack.c.l.b16 %v3112
        %v3248 = vunpack.c.l.b16 %v3113
        %v3249 = vunpack.c.l.b16 %v3114
        %v3250 = vunpack.c.l.b16 %v3115
        %v3251 = vunpack.c.l.b16 %v3116
        %v3252 = vunpack.c.l.b16 %v3117
        %v3253 = vunpack.c.l.b16 %v3118
        %v3254 = vunpack.c.l.b16 %v3119
        %v3255 = vpack.c.b16 %v3192, %v3191
        %v3256 = vpack.c.b16 %v3194, %v3193
        %v3257 = vpack.c.b16 %v3196, %v3195
        %v3258 = vpack.c.b16 %v3198, %v3197
        %v3259 = vpack.c.b16 %v3200, %v3199
        %v3260 = vpack.c.b16 %v3202, %v3201
        %v3261 = vpack.c.b16 %v3204, %v3203
        %v3262 = vpack.c.b16 %v3206, %v3205
        %v3263 = vpack.c.b16 %v3208, %v3207
        %v3264 = vpack.c.b16 %v3210, %v3209
        %v3265 = vpack.c.b16 %v3212, %v3211
        %v3266 = vpack.c.b16 %v3214, %v3213
        %v3267 = vpack.c.b16 %v3216, %v3215
        %v3268 = vpack.c.b16 %v3218, %v3217
        %v3269 = vpack.c.b16 %v3220, %v3219
        %v3270 = vpack.c.b16 %v3222, %v3221
        %v3271 = vpack.c.b16 %v3224, %v3223
        %v3272 = vpack.c.b16 %v3226, %v3225
        %v3273 = vpack.c.b16 %v3228, %v3227
        %v3274 = vpack.c.b16 %v3230, %v3229
        %v3275 = vpack.c.b16 %v3232, %v3231
        %v3276 = vpack.c.b16 %v3234, %v3233
        %v3277 = vpack.c.b16 %v3236, %v3235
        %v3278 = vpack.c.b16 %v3238, %v3237
        %v3279 = vpack.c.b16 %v3240, %v3239
        %v3280 = vpack.c.b16 %v3242, %v3241
        %v3281 = vpack.c.b16 %v3244, %v3243
        %v3282 = vpack.c.b16 %v3246, %v3245
        %v3283 = vpack.c.b16 %v3248, %v3247
        %v3284 = vpack.c.b16 %v3250, %v3249
        %v3285 = vpack.c.b16 %v3252, %v3251
        %v3286 = vpack.c.b16 %v3254, %v3253
        %3319 = vmatprep.subr.bf16.mxu0 0
        %3320 = vmatpush1.bf16.msra.mxu0 %v3255
        %3321 = vmatprep.subr.bf16.mxu0 0
        %3322 = vmatpush1.bf16.msra.mxu0 %v3256
        %3323 = vmatprep.subr.bf16.mxu0 0
        %3324 = vmatpush1.bf16.msra.mxu0 %v3257
        %3325 = vmatprep.subr.bf16.mxu0 0
        %3326 = vmatpush1.bf16.msra.mxu0 %v3258
        %3327 = vmatprep.subr.bf16.mxu0 0
        %3328 = vmatpush1.bf16.msra.mxu0 %v3259
        %3329 = vmatprep.subr.bf16.mxu0 0
        %3330 = vmatpush1.bf16.msra.mxu0 %v3260
        %3331 = vmatprep.subr.bf16.mxu0 0
        %3332 = vmatpush1.bf16.msra.mxu0 %v3261
        %3333 = vmatprep.subr.bf16.mxu0 0
        %3334 = vmatpush1.bf16.msra.mxu0 %v3262
        %3335 = vmatprep.subr.bf16.mxu0 0
        %3336 = vmatpush1.bf16.msra.mxu0 %v3263
        %3337 = vmatprep.subr.bf16.mxu0 0
        %3338 = vmatpush1.bf16.msra.mxu0 %v3264
        %3339 = vmatprep.subr.bf16.mxu0 0
        %3340 = vmatpush1.bf16.msra.mxu0 %v3265
        %3341 = vmatprep.subr.bf16.mxu0 0
        %3342 = vmatpush1.bf16.msra.mxu0 %v3266
        %3343 = vmatprep.subr.bf16.mxu0 0
        %3344 = vmatpush1.bf16.msra.mxu0 %v3267
        %3345 = vmatprep.subr.bf16.mxu0 0
        %3346 = vmatpush1.bf16.msra.mxu0 %v3268
        %3347 = vmatprep.subr.bf16.mxu0 0
        %3348 = vmatpush1.bf16.msra.mxu0 %v3269
        %3349 = vmatprep.subr.bf16.mxu0 0
        %3350 = vmatpush1.bf16.msra.mxu0 %v3270
        %3351 = vmatprep.mubr.bf16.mxu0 %v3053
        %3352 = vmatmul.mubr.bf16.gmra.mrb[0].mxu0 %v3052
        %v3353 = vpop.f32.mrb[0].mxu0
        %v3354 = vadd.f32 %v3125, %v3353
        %v3355 = vpop.f32.mrb[0].mxu0
        %v3356 = vpop.f32.mrb[0].mxu0
        %v3357 = vadd.f32 %v3125, %v3356
        %v3358 = vpop.f32.mrb[0].mxu0
        %3359 = vdwg.mxu0
        %3360 = vmatprep.subr.bf16.mxu0 0
        %3361 = vmatpush1.bf16.msra.mxu0 %v3271
        %3362 = vmatprep.subr.bf16.mxu0 0
        %3363 = vmatpush1.bf16.msra.mxu0 %v3272
        %3364 = vmatprep.subr.bf16.mxu0 0
        %3365 = vmatpush1.bf16.msra.mxu0 %v3273
        %3366 = vmatprep.subr.bf16.mxu0 0
        %3367 = vmatpush1.bf16.msra.mxu0 %v3274
        %3368 = vmatprep.subr.bf16.mxu0 0
        %3369 = vmatpush1.bf16.msra.mxu0 %v3275
        %3370 = vmatprep.subr.bf16.mxu0 0
        %3371 = vmatpush1.bf16.msra.mxu0 %v3276
        %3372 = vmatprep.subr.bf16.mxu0 0
        %3373 = vmatpush1.bf16.msra.mxu0 %v3277
        %3374 = vmatprep.subr.bf16.mxu0 0
        %3375 = vmatpush1.bf16.msra.mxu0 %v3278
        %3376 = vmatprep.subr.bf16.mxu0 0
        %3377 = vmatpush1.bf16.msra.mxu0 %v3279
        %3378 = vmatprep.subr.bf16.mxu0 0
        %3379 = vmatpush1.bf16.msra.mxu0 %v3280
        %3380 = vmatprep.subr.bf16.mxu0 0
        %3381 = vmatpush1.bf16.msra.mxu0 %v3281
        %3382 = vmatprep.subr.bf16.mxu0 0
        %3383 = vmatpush1.bf16.msra.mxu0 %v3282
        %3384 = vmatprep.subr.bf16.mxu0 0
        %3385 = vmatpush1.bf16.msra.mxu0 %v3283
        %3386 = vmatprep.subr.bf16.mxu0 0
        %3387 = vmatpush1.bf16.msra.mxu0 %v3284
        %3388 = vmatprep.subr.bf16.mxu0 0
        %3389 = vmatpush1.bf16.msra.mxu0 %v3285
        %3390 = vmatprep.subr.bf16.mxu0 0
        %3391 = vmatpush1.bf16.msra.mxu0 %v3286
        %3392 = vmatprep.mubr.bf16.mxu0 %v3055
        %3393 = vmatmul.mubr.bf16.gmra.mrb[0].mxu0 %v3054
        %v3394 = vpop.f32.mrb[0].mxu0
        %v3395 = vadd.f32 %v3354, %v3394
        %v3396 = vpop.f32.mrb[0].mxu0
        %v3397 = vpop.f32.mrb[0].mxu0
        %v3398 = vadd.f32 %v3357, %v3397
        %v3399 = vpop.f32.mrb[0].mxu0
        %3400 = vdwg.mxu0
        %3401 = vst [vmem:[%s313] sm:$0xff] %v3395
        %3402 = vst [vmem:[%s313 + $0x8] sm:$0xff] %v3398
        %s3403 = smul.u32 2, %s20
        %p3404 = scmp.lt.s32.totalorder %s3403, 3
        %s3405 = scalar_select %p3404, %s3403, 3
        %s3406 = smul.addr %s3405, 8
        %s3407 = scalar_lea.vmem %s7, %s3406
        // Predicated region
        $region57: #{mlp_forward.1} parent=47 // pred_check
          %p3408 = pneg %p190
        $region58: #{mlp_forward.1} parent=47 // pred_check_branch
          %3410 = sbr.rel (%p3408) target = $region60
        $region59: #{mlp_forward.1} parent=47 // pred_region
          %s3411 = smul.u32 2, %s20
        $region60: #{mlp_forward.1} parent=47 // pred_fallthru
          _
      $region48: #{mlp_forward.1} parent=5 // pred_fallthru
        _
      %p3412 = scmp.le.s32.totalorder 2, %s15
      // Predicated region
      $region61: #{mlp_forward.1} parent=5 // pred_check
        %p3413 = pneg %p3412
      $region62: #{mlp_forward.1} parent=5 // pred_check_branch
        %3415 = sbr.rel (%p3413) target = $region64
      $region63: #{mlp_forward.1} parent=5 // pred_region
        %s3416 = ssub.s32 %s15, 2
        // Predicated region
        $region65: #{mlp_forward.1} parent=63 // pred_check
          %p3417 = pneg %p196
        $region66: #{mlp_forward.1} parent=63 // pred_check_branch
          %3419 = sbr.rel (%p3417) target = $region68
        $region67: #{mlp_forward.1} parent=63 // pred_region
          %s3420 = smul.u32 2, %s21
          %p3421 = scmp.lt.s32.totalorder %s3420, 3
          %s3422 = scalar_select %p3421, %s3420, 3
          %s3423 = smul.addr %s3422, 8
          %s3424 = scalar_lea.vmem %s7, %s3423
        $region68: #{mlp_forward.1} parent=63 // pred_fallthru
          _
      $region64: #{mlp_forward.1} parent=5 // pred_fallthru
        _
    $region6: #{mlp_forward.1} parent=1 // loop_footer
      %s19 = sadd.s32 1, %s15
    $region7: #{mlp_forward.1} parent=1 // loop_footer_branch
      %14 = sbr.rel target = $region3
    $region8: #{mlp_forward.1} parent=1 // loop_exit
      _
    %3425 = vsyncpa [#allocation3], 1
    %s3426 = scalar_lea.sflag [#allocation3], 1
    %3427 = vsyncpa %s3426, 1
    %3428 = vsyncpa [#allocation5], 1

</llo_original>
